<compile_context>
chip_gen: v6e
topology: v6e:2x2x1
jax: 0.10.0
libtpu: 0.0.40
codegen_flags: <defaults>
</compile_context>

<pallas_src>
import functools

import jax
import jax.numpy as jnp
from jax.experimental import pallas as pl
from jax.experimental.pallas import tpu as pltpu


def channel_attention_kernel(x_ref, w1t_ref, w2t_ref, o_ref,
                             sum_acc, max_acc, *, inv_hw, hw_true, needs_mask):
    # x_ref:   (TB, C, THW)   batch block x HW chunk (native dtype)
    # w1t_ref: (C, Ch)        first 1x1 conv weight, transposed, f32
    # w2t_ref: (Ch, C)        second 1x1 conv weight, transposed, f32
    # o_ref:   (1, TB, C)     per-batch attention weights (lane-dense, full C)
    # sum_acc: (TB, C) f32    running sum over HW
    # max_acc: (TB, C) f32    running max over HW
    k = pl.program_id(1)

    @pl.when(k == 0)
    def _init():
        sum_acc[...] = jnp.zeros_like(sum_acc)
        max_acc[...] = jnp.full_like(max_acc, -jnp.inf)

    x = x_ref[...]                                            # (TB, C, THW)
    thw = x.shape[-1]

    # Partial sum over this HW chunk; accumulate in f32.
    # (Zero padding of HW, if any, does not affect the sum: 1/HW uses true HW.)
    sum_acc[...] += jnp.sum(x, axis=-1, dtype=jnp.float32)

    if needs_mask:
        # HW was zero-padded to a multiple of 128: mask the padded tail so it
        # can never win the max.
        idx = jax.lax.broadcasted_iota(jnp.int32, (1, 1, thw), 2)
        valid = (k * thw + idx) < hw_true
        x_for_max = jnp.where(valid, x, jnp.array(-jnp.inf, dtype=x.dtype))
    else:
        x_for_max = x
    max_acc[...] = jnp.maximum(max_acc[...],
                               jnp.max(x_for_max, axis=-1).astype(jnp.float32))

    @pl.when(k == pl.num_programs(1) - 1)
    def _finalize():
        avg = sum_acc[...] * inv_hw                           # (TB, C)
        mx = max_acc[...]                                     # (TB, C)
        w1t = w1t_ref[...]                                    # (C, Ch)
        w2t = w2t_ref[...]                                    # (Ch, C)
        # Two small dots (no sublane-axis concat). Second conv is linear and
        # bias-free, so fc(avg)+fc(max) folds into a single second matmul.
        h = (jnp.maximum(jnp.dot(avg, w1t,
                                 preferred_element_type=jnp.float32), 0.0)
             + jnp.maximum(jnp.dot(mx, w1t,
                                   preferred_element_type=jnp.float32), 0.0))
        y = jnp.dot(h, w2t, preferred_element_type=jnp.float32)  # (TB, C)
        o_ref[...] = jax.nn.sigmoid(y)[None, :, :].astype(o_ref.dtype)


def _target_block_bytes():
    """Per-step streamed-block budget, tuned per TPU generation."""
    try:
        kind = jax.devices()[0].device_kind.lower()
    except Exception:
        return 4 << 20
    if "v5 lite" in kind or "v5e" in kind or "v5lite" in kind:
        return 3 << 20
    if "v6" in kind:
        return 4 << 20
    if "v7" in kind or "7x" in kind:
        return 8 << 20
    return 4 << 20


def _plan_hw_tiling(C, HW, itemsize, target_bytes):
    """Return (HW_padded, THW): lane-aligned HW chunking within the budget."""
    if C * HW * itemsize <= target_bytes:
        return HW, HW                        # small problem: single chunk
    hw_pad = ((HW + 127) // 128) * 128       # pad so 128-multiples can tile it
    max_chunks = max(1, (target_bytes // (C * itemsize)) // 128)
    thw = min(128 * max_chunks, hw_pad)
    while hw_pad % thw != 0:
        thw -= 128
    return hw_pad, max(thw, 128)


def _choose_tb(B):
    """Largest TB <= 8 dividing B while keeping >= 2 batch blocks (megacore)."""
    best = 1
    for tb in range(1, min(8, B) + 1):
        if B % tb == 0 and (B // tb >= 2 or B == 1):
            best = tb
    return best


@jax.jit
def channel_attention(x, w1, w2):
    """x: (B, C, H, W) NCHW; w1: (C//r, C); w2: (C, C//r). Returns (B, C, 1, 1)."""
    B, C, H, W = x.shape
    Ch = w1.shape[0]
    HW = H * W
    itemsize = jnp.dtype(x.dtype).itemsize

    target_bytes = _target_block_bytes()
    hw_pad, THW = _plan_hw_tiling(C, HW, itemsize, target_bytes)
    TB = _choose_tb(B)
    assert B % TB == 0 and hw_pad % THW == 0   # no dropped remainder work

    x_flat = x.reshape(B, C, HW)
    needs_mask = hw_pad != HW
    if needs_mask:
        x_flat = jnp.pad(x_flat, ((0, 0), (0, 0), (0, hw_pad - HW)))

    grid = (B // TB, hw_pad // THW)

    # Pre-transpose / pre-cast the tiny weights so the kernel does no layout work.
    w1t = w1.T.astype(jnp.float32)           # (C, Ch)
    w2t = w2.T.astype(jnp.float32)           # (Ch, C)

    # Explicit VMEM budget: double-buffered x block + weights + output block
    # + scratch, x1.5 headroom, capped at 48 MiB (< v7x's 64 MiB physical VMEM).
    x_block_bytes = TB * C * THW * itemsize
    w_bytes = 2 * C * Ch * 4
    out_block_bytes = TB * C * itemsize
    scratch_bytes = 2 * TB * C * 4
    need = 2 * x_block_bytes + 2 * w_bytes + 2 * out_block_bytes + scratch_bytes
    vmem_limit = int(min(48 << 20, max(16 << 20, int(need * 1.5))))

    kernel = functools.partial(channel_attention_kernel,
                               inv_hw=1.0 / HW, hw_true=HW,
                               needs_mask=needs_mask)

    out = pl.pallas_call(
        kernel,
        out_shape=jax.ShapeDtypeStruct((B // TB, TB, C), x.dtype),
        grid_spec=pltpu.PrefetchScalarGridSpec(
            num_scalar_prefetch=0,
            grid=grid,
            in_specs=[
                # NOTE: pipeline_mode=pl.Buffered(3) is a possible further sweep
                # for the DMA-limited x stream; kept at default double-buffering.
                pl.BlockSpec((TB, C, THW), lambda b, k: (b, 0, k)),
                pl.BlockSpec((C, Ch), lambda b, k: (0, 0)),
                pl.BlockSpec((Ch, C), lambda b, k: (0, 0)),
            ],
            out_specs=pl.BlockSpec((1, TB, C), lambda b, k: (b, 0, 0)),
            scratch_shapes=[
                pltpu.VMEM((TB, C), jnp.float32),   # running sum
                pltpu.VMEM((TB, C), jnp.float32),   # running max
            ],
        ),
        compiler_params=pltpu.CompilerParams(
            dimension_semantics=("parallel", "arbitrary"),
            vmem_limit_bytes=vmem_limit,
        ),
    )(x_flat, w1t, w2t)
    return out.reshape(B, C, 1, 1)


def channel_attention_ref(x, w1, w2):
    # Pure-JAX reference matching the PyTorch module.
    avg = jnp.mean(x, axis=(2, 3))          # (B, C)
    mx = jnp.max(x, axis=(2, 3))            # (B, C)

    def fc(v):
        return jnp.maximum(v @ w1.T, 0.0) @ w2.T

    y = jax.nn.sigmoid(fc(avg) + fc(mx))
    return y[:, :, None, None]


if __name__ == "__main__":
    B, C, H, W = 2, 64, 16, 16
    ratio = 16
    Ch = C // ratio  # 4

    key = jax.random.PRNGKey(0)
    kx, k1, k2 = jax.random.split(key, 3)
    x = jax.random.normal(kx, (B, C, H, W), dtype=jnp.float32)
    # Conv2d(C, Ch, 1) weight (Ch, C, 1, 1) -> squeeze to (Ch, C); similarly w2.
    w1 = 0.1 * jax.random.normal(k1, (Ch, C), dtype=jnp.float32)
    w2 = 0.1 * jax.random.normal(k2, (C, Ch), dtype=jnp.float32)

    out = channel_attention(x, w1, w2)
    out = jax.block_until_ready(out)

    ref = channel_attention_ref(x, w1, w2)
    assert out.shape == (B, C, 1, 1), out.shape
    assert jnp.allclose(out, ref, atol=1e-5, rtol=1e-5), (
        float(jnp.max(jnp.abs(out - ref))))

    print("KERNEL_OK")
</pallas_src>

<mosaic_0001>
module attributes {stable_mosaic.version = 11 : i64} {
  func.func @channel_attention_kernel(%arg0: i32, %arg1: i32, %arg2: memref<1x64x256xf32, #tpu.memory_space<vmem>>, %arg3: memref<64x4xf32, #tpu.memory_space<vmem>>, %arg4: memref<4x64xf32, #tpu.memory_space<vmem>>, %arg5: memref<1x1x64xf32, #tpu.memory_space<vmem>>, %arg6: memref<1x64xf32, #tpu.memory_space<vmem>>, %arg7: memref<1x64xf32, #tpu.memory_space<vmem>>) attributes {dimension_semantics = [#tpu.dimension_semantics<parallel>, #tpu.dimension_semantics<arbitrary>], iteration_bounds = array<i64: 2, 1>, scalar_prefetch = 0 : i64, scratch_operands = 2 : i64, tpu.core_type = #tpu.core_type<tc>, window_params = [{transform_indices = @transform_0, window_bounds = array<i64: 1, 64, 256>}, {pipeline_mode = #tpu.pipeline_mode<synchronous>, transform_indices = @transform_1, window_bounds = array<i64: 64, 4>}, {pipeline_mode = #tpu.pipeline_mode<synchronous>, transform_indices = @transform_2, window_bounds = array<i64: 4, 64>}, {transform_indices = @transform_3, window_bounds = array<i64: 1, 1, 64>}]} {
    %c0_i32 = arith.constant 0 : i32
    %0 = arith.cmpi eq, %arg1, %c0_i32 : i32
    %1 = arith.extui %0 : i1 to i32
    %c0_i32_0 = arith.constant 0 : i32
    %2 = arith.cmpi ne, %1, %c0_i32_0 : i32
    scf.if %2 {
      %cst_14 = arith.constant 0.000000e+00 : f32
      %15 = vector.broadcast %cst_14 : f32 to vector<1x64xf32>
      %c0_15 = arith.constant 0 : index
      %c0_16 = arith.constant 0 : index
      %16 = vector.load %arg6[%c0_15, %c0_16] : memref<1x64xf32, #tpu.memory_space<vmem>>, vector<1x64xf32>
      tpu.vector_store %arg6[%c0_15, %c0_16], %15 {strides = array<i32>} : memref<1x64xf32, #tpu.memory_space<vmem>>, vector<1x64xf32>,
      %cst_17 = arith.constant 0xFF800000 : f32
      %17 = vector.broadcast %cst_17 : f32 to vector<1x64xf32>
      %c0_18 = arith.constant 0 : index
      %c0_19 = arith.constant 0 : index
      %18 = vector.load %arg7[%c0_18, %c0_19] : memref<1x64xf32, #tpu.memory_space<vmem>>, vector<1x64xf32>
      tpu.vector_store %arg7[%c0_18, %c0_19], %17 {strides = array<i32>} : memref<1x64xf32, #tpu.memory_space<vmem>>, vector<1x64xf32>,
    } else {
    }
    %c0 = arith.constant 0 : index
    %c0_1 = arith.constant 0 : index
    %c0_2 = arith.constant 0 : index
    %3 = vector.load %arg2[%c0, %c0_1, %c0_2] : memref<1x64x256xf32, #tpu.memory_space<vmem>>, vector<1x64x256xf32>
    %c0_3 = arith.constant 0 : index
    %c0_4 = arith.constant 0 : index
    %4 = vector.load %arg6[%c0_3, %c0_4] : memref<1x64xf32, #tpu.memory_space<vmem>>, vector<1x64xf32>
    %cst = arith.constant dense<0.000000e+00> : vector<1x64xf32>
    %5 = vector.multi_reduction <add>, %3, %cst [2] : vector<1x64x256xf32> to vector<1x64xf32>
    %6 = arith.addf %4, %5 : vector<1x64xf32>
    %c0_5 = arith.constant 0 : index
    %c0_6 = arith.constant 0 : index
    %7 = vector.load %arg6[%c0_5, %c0_6] : memref<1x64xf32, #tpu.memory_space<vmem>>, vector<1x64xf32>
    tpu.vector_store %arg6[%c0_5, %c0_6], %6 {strides = array<i32>} : memref<1x64xf32, #tpu.memory_space<vmem>>, vector<1x64xf32>,
    %c0_7 = arith.constant 0 : index
    %c0_8 = arith.constant 0 : index
    %8 = vector.load %arg7[%c0_7, %c0_8] : memref<1x64xf32, #tpu.memory_space<vmem>>, vector<1x64xf32>
    %cst_9 = arith.constant dense<0xFF800000> : vector<1x64xf32>
    %9 = vector.multi_reduction <maximumf>, %3, %cst_9 [2] : vector<1x64x256xf32> to vector<1x64xf32>
    %10 = arith.maximumf %8, %9 : vector<1x64xf32>
    %c0_10 = arith.constant 0 : index
    %c0_11 = arith.constant 0 : index
    %11 = vector.load %arg7[%c0_10, %c0_11] : memref<1x64xf32, #tpu.memory_space<vmem>>, vector<1x64xf32>
    tpu.vector_store %arg7[%c0_10, %c0_11], %10 {strides = array<i32>} : memref<1x64xf32, #tpu.memory_space<vmem>>, vector<1x64xf32>,
    %c0_i32_12 = arith.constant 0 : i32
    %12 = arith.cmpi eq, %arg1, %c0_i32_12 : i32
    %13 = arith.extui %12 : i1 to i32
    %c0_i32_13 = arith.constant 0 : i32
    %14 = arith.cmpi ne, %13, %c0_i32_13 : i32
    scf.if %14 {
      %c0_14 = arith.constant 0 : index
      %c0_15 = arith.constant 0 : index
      %15 = vector.load %arg6[%c0_14, %c0_15] : memref<1x64xf32, #tpu.memory_space<vmem>>, vector<1x64xf32>
      %cst_16 = arith.constant 3.906250e-03 : f32
      %16 = vector.broadcast %cst_16 : f32 to vector<1x64xf32>
      %17 = arith.mulf %15, %16 : vector<1x64xf32>
      %c0_17 = arith.constant 0 : index
      %c0_18 = arith.constant 0 : index
      %18 = vector.load %arg7[%c0_17, %c0_18] : memref<1x64xf32, #tpu.memory_space<vmem>>, vector<1x64xf32>
      %c0_19 = arith.constant 0 : index
      %c0_20 = arith.constant 0 : index
      %19 = vector.load %arg3[%c0_19, %c0_20] : memref<64x4xf32, #tpu.memory_space<vmem>>, vector<64x4xf32>
      %c0_21 = arith.constant 0 : index
      %c0_22 = arith.constant 0 : index
      %20 = vector.load %arg4[%c0_21, %c0_22] : memref<4x64xf32, #tpu.memory_space<vmem>>, vector<4x64xf32>
      %cst_23 = arith.constant dense<0.000000e+00> : vector<1x4xf32>
      %21 = tpu.matmul %17, %19, %cst_23 {dimension_numbers = #tpu.dot_dimension_numbers<[1], [0], [0], [1], [0, 0, 1, 1], [], []>} : vector<1x64xf32>, vector<64x4xf32>, vector<1x4xf32> -> vector<1x4xf32>
      %cst_24 = arith.constant 0.000000e+00 : f32
      %22 = vector.broadcast %cst_24 : f32 to vector<1x4xf32>
      %23 = arith.maximumf %21, %22 : vector<1x4xf32>
      %cst_25 = arith.constant dense<0.000000e+00> : vector<1x4xf32>
      %24 = tpu.matmul %18, %19, %cst_25 {dimension_numbers = #tpu.dot_dimension_numbers<[1], [0], [0], [1], [0, 0, 1, 1], [], []>} : vector<1x64xf32>, vector<64x4xf32>, vector<1x4xf32> -> vector<1x4xf32>
      %cst_26 = arith.constant 0.000000e+00 : f32
      %25 = vector.broadcast %cst_26 : f32 to vector<1x4xf32>
      %26 = arith.maximumf %24, %25 : vector<1x4xf32>
      %27 = arith.addf %23, %26 : vector<1x4xf32>
      %cst_27 = arith.constant dense<0.000000e+00> : vector<1x64xf32>
      %28 = tpu.matmul %27, %20, %cst_27 {dimension_numbers = #tpu.dot_dimension_numbers<[1], [0], [0], [1], [0, 0, 1, 1], [], []>} : vector<1x4xf32>, vector<4x64xf32>, vector<1x64xf32> -> vector<1x64xf32>
      %29 = arith.negf %28 : vector<1x64xf32>
      %30 = math.exp %29 : vector<1x64xf32>
      %cst_28 = arith.constant 1.000000e+00 : f32
      %31 = vector.broadcast %cst_28 : f32 to vector<1x64xf32>
      %32 = arith.addf %31, %30 : vector<1x64xf32>
      %33 = arith.divf %31, %32 : vector<1x64xf32>
      %34 = vector.shape_cast %33 : vector<1x64xf32> to vector<1x1x64xf32>
      %c0_29 = arith.constant 0 : index
      %c0_30 = arith.constant 0 : index
      %c0_31 = arith.constant 0 : index
      %35 = vector.load %arg5[%c0_29, %c0_30, %c0_31] : memref<1x1x64xf32, #tpu.memory_space<vmem>>, vector<1x1x64xf32>
      tpu.vector_store %arg5[%c0_29, %c0_30, %c0_31], %34 {strides = array<i32>} : memref<1x1x64xf32, #tpu.memory_space<vmem>>, vector<1x1x64xf32>,
    } else {
    }
    return
  }
  func.func @transform_0(%arg0: i32, %arg1: i32) -> (i32, i32, i32) {
    %c0_i32 = arith.constant 0 : i32
    %c0_i32_0 = arith.constant 0 : i32
    return %arg0, %c0_i32, %arg1 : i32, i32, i32
  }
  func.func @transform_1(%arg0: i32, %arg1: i32) -> (i32, i32) {
    %c0_i32 = arith.constant 0 : i32
    %c0_i32_0 = arith.constant 0 : i32
    %c0_i32_1 = arith.constant 0 : i32
    return %c0_i32, %c0_i32_0 : i32, i32
  }
  func.func @transform_2(%arg0: i32, %arg1: i32) -> (i32, i32) {
    %c0_i32 = arith.constant 0 : i32
    %c0_i32_0 = arith.constant 0 : i32
    %c0_i32_1 = arith.constant 0 : i32
    return %c0_i32, %c0_i32_0 : i32, i32
  }
  func.func @transform_3(%arg0: i32, %arg1: i32) -> (i32, i32, i32) {
    %c0_i32 = arith.constant 0 : i32
    %c0_i32_0 = arith.constant 0 : i32
    %c0_i32_1 = arith.constant 0 : i32
    return %arg0, %c0_i32, %c0_i32_0 : i32, i32, i32
  }
}

</mosaic_0001>

<llo_original>
// kernel: channel_attention.1
$region0: #{channel_attention.1}
  #allocation0 [shape = 'u32[]', space=smem, size = 0x4, offset = 0x4, fixed_abs, tag = 'smem constant byte address 0x4 - core index']
  #allocation1 [shape = 'u32[144,128]{1,0:T(1,128)}', space=vmem, size = 0x12000, scoped, tag = 'internal scratch']
  #allocation2 [shape = 'f32[1,64]{1,0:T(1,128)}', space=vmem, size = 0x200, scoped, tag = 'scratch operand']
  #allocation3 [shape = 'f32[1,64]{1,0:T(1,128)}', space=vmem, size = 0x200, scoped, tag = 'scratch operand']
  %s0 = inlined_call_operand.vmem [shape: f32[2,64,256], index: 0, kind: input, shape index: {}]
  %s1 = inlined_call_operand.vmem [shape: f32[64,4], index: 1, kind: input, shape index: {}]
  %s2 = inlined_call_operand.vmem [shape: f32[4,64], index: 2, kind: input, shape index: {}]
  %s3 = inlined_call_operand.hbm [shape: f32[2,1,64], index: 3, kind: output, shape index: {}]
  %s4 = sld [smem:[#allocation0]]
  $region53: #{channel_attention.1} parent=0
    _
  %s6 = ssub.s32 1, %s4
  %s7 = scalar_select 0, %s6, %s4
  $region1: #{channel_attention.1} parent=0
    #allocation4 [shape = 'u8[1024]{0}', space=vmem, size = 0x400, scoped, tag = 'output window, operand 0']
    #allocation5 [shape = 's32[2]{0}', space=sflag, size = 0x8, scoped, tag = 'scoped memory for channel_attention.1']
    %8 = vsyncpa [#allocation5], 0
    %s9 = scalar_lea.sflag [#allocation5], 1
    %10 = vsyncpa %s9, 0
    loop: start=0, step=1, limit=4
    $region2: #{channel_attention.1} parent=1 // loop_pre_header
      _
    $region3: #{channel_attention.1} parent=1 // loop_header
      %s12 = sphi 0, %s16
      %p13 = scmp.ge.s32.totalorder %s12, 4
      %s19 = sphi 0, %s31
      %s20 = sphi 0, %s27
      %s21 = sphi 0, %s19
      %s22 = sphi 0, %s20
      %s23 = sphi 0, %s21
      %s24 = sphi 0, %s22
      %s36 = sphi 0, %s38
      %s39 = sphi 0, %s36
      %s40 = sphi 0, %s39
      %s56 = sphi 0, %s40
      %s60 = sphi 0, %s60
      %s62 = sphi 0, %s60
      %s63 = sphi 0, %s62
      %s77 = sphi 0, %s63
      %s81 = sphi 0, %s81
      %s83 = sphi 0, %s81
      %s84 = sphi 0, %s83
      %s98 = sphi 0, %s84
      %s104 = sphi 0, %s106
      %s107 = sphi 0, %s104
      %s108 = sphi 0, %s107
      %s124 = sphi 0, %s108
    $region4: #{channel_attention.1} parent=1 // loop_header_branch
      %15 = sbr.rel (%p13) target = $region8
    $region5: #{channel_attention.1} parent=1 // loop_body
      %s17 = ssub.s32 %s12, 1
      %s18 = ssub.s32 %s12, 2
      %s25 = sadd.s32 1, %s20
      %p26 = scmp.ge.s32.totalorder %s25, 1
      %s27 = scalar_select %p26, 0, %s25
      %s28 = sadd.s32 1, %s19
      %s29 = scalar_select %p26, %s28, %s19
      %p30 = scmp.ge.s32.totalorder %s29, 2
      %s31 = scalar_select %p30, 0, %s29
      %s32 = ssub.s32 %s19, %s31
      %s33 = ssub.s32 %s20, %s27
      %s34 = sor.u32 %s32, %s33
      %p35 = scmp.eq.s32.totalorder %s34, 0
      %s37 = sadd.s32 %s36, 1
      %s38 = scalar_select %p35, %s36, %s37
      %p41 = pneg %p35
      %p42 = scmp.eq.s32.totalorder %s12, 1
      %p43 = por %p41, %p42
      %p44 = scmp.ne.s32.totalorder %s36, %s39
      %p45 = scmp.eq.s32.totalorder %s12, 0
      %p46 = por %p44, %p45
      %p47 = scmp.ne.s32.totalorder %s36, %s39
      %p48 = scmp.eq.s32.totalorder %s17, 1
      %p49 = por %p47, %p48
      %p50 = scmp.ne.s32.totalorder %s39, %s40
      %p51 = scmp.eq.s32.totalorder %s17, 0
      %p52 = por %p50, %p51
      %p53 = scmp.ne.s32.totalorder %s39, %s40
      %p54 = scmp.eq.s32.totalorder %s18, 1
      %p55 = por %p53, %p54
      %p57 = scmp.ne.s32.totalorder %s40, %s56
      %p58 = scmp.eq.s32.totalorder %s18, 0
      %p59 = por %p57, %p58
      %s61 = sadd.s32 %s60, 1
      %p64 = scmp.eq.s32.totalorder %s12, 1
      %p65 = scmp.ne.s32.totalorder %s60, %s62
      %p66 = scmp.eq.s32.totalorder %s12, 0
      %p67 = por %p65, %p66
      %p68 = scmp.ne.s32.totalorder %s60, %s62
      %p69 = scmp.eq.s32.totalorder %s17, 1
      %p70 = por %p68, %p69
      %p71 = scmp.ne.s32.totalorder %s62, %s63
      %p72 = scmp.eq.s32.totalorder %s17, 0
      %p73 = por %p71, %p72
      %p74 = scmp.ne.s32.totalorder %s62, %s63
      %p75 = scmp.eq.s32.totalorder %s18, 1
      %p76 = por %p74, %p75
      %p78 = scmp.ne.s32.totalorder %s63, %s77
      %p79 = scmp.eq.s32.totalorder %s18, 0
      %p80 = por %p78, %p79
      %s82 = sadd.s32 %s81, 1
      %p85 = scmp.eq.s32.totalorder %s12, 1
      %p86 = scmp.ne.s32.totalorder %s81, %s83
      %p87 = scmp.eq.s32.totalorder %s12, 0
      %p88 = por %p86, %p87
      %p89 = scmp.ne.s32.totalorder %s81, %s83
      %p90 = scmp.eq.s32.totalorder %s17, 1
      %p91 = por %p89, %p90
      %p92 = scmp.ne.s32.totalorder %s83, %s84
      %p93 = scmp.eq.s32.totalorder %s17, 0
      %p94 = por %p92, %p93
      %p95 = scmp.ne.s32.totalorder %s83, %s84
      %p96 = scmp.eq.s32.totalorder %s18, 1
      %p97 = por %p95, %p96
      %p99 = scmp.ne.s32.totalorder %s84, %s98
      %p100 = scmp.eq.s32.totalorder %s18, 0
      %p101 = por %p99, %p100
      %s102 = ssub.s32 %s19, %s31
      %p103 = scmp.eq.s32.totalorder %s102, 0
      %s105 = sadd.s32 %s104, 1
      %s106 = scalar_select %p103, %s104, %s105
      %p109 = pneg %p103
      %p110 = scmp.eq.s32.totalorder %s12, 1
      %p111 = por %p109, %p110
      %p112 = scmp.ne.s32.totalorder %s104, %s107
      %p113 = scmp.eq.s32.totalorder %s12, 0
      %p114 = por %p112, %p113
      %p115 = scmp.ne.s32.totalorder %s104, %s107
      %p116 = scmp.eq.s32.totalorder %s17, 1
      %p117 = por %p115, %p116
      %p118 = scmp.ne.s32.totalorder %s107, %s108
      %p119 = scmp.eq.s32.totalorder %s17, 0
      %p120 = por %p118, %p119
      %p121 = scmp.ne.s32.totalorder %s107, %s108
      %p122 = scmp.eq.s32.totalorder %s18, 1
      %p123 = por %p121, %p122
      %p125 = scmp.ne.s32.totalorder %s108, %s124
      %p126 = scmp.eq.s32.totalorder %s18, 0
      %p127 = por %p125, %p126
      %p128 = scmp.le.s32.totalorder 1, %s12
      %p129 = scmp.lt.s32.totalorder %s12, 3
      %p130 = pnand %p128, %p129
      %p131 = pneg %p130
      // Predicated region
      $region9: #{channel_attention.1} parent=5 // pred_check
        _
      $region10: #{channel_attention.1} parent=5 // pred_check_branch
        %133 = sbr.rel (%p130) target = $region12
      $region11: #{channel_attention.1} parent=5 // pred_region
        %s134 = ssub.s32 %s12, 1
        // Predicated region
        $region13: #{channel_attention.1} parent=11 // pred_check
          %p135 = pneg %p73
        $region14: #{channel_attention.1} parent=11 // pred_check_branch
          %137 = sbr.rel (%p135) target = $region16
        $region15: #{channel_attention.1} parent=11 // pred_region
          _
        $region16: #{channel_attention.1} parent=11 // pred_fallthru
          _
        // Predicated region
        $region17: #{channel_attention.1} parent=11 // pred_check
          %p138 = pneg %p94
        $region18: #{channel_attention.1} parent=11 // pred_check_branch
          %140 = sbr.rel (%p138) target = $region20
        $region19: #{channel_attention.1} parent=11 // pred_region
          _
        $region20: #{channel_attention.1} parent=11 // pred_fallthru
          _
      $region12: #{channel_attention.1} parent=5 // pred_fallthru
        _
      %p141 = scmp.lt.s32.totalorder %s12, 2
      // Predicated region
      $region21: #{channel_attention.1} parent=5 // pred_check
        %p142 = pneg %p141
      $region22: #{channel_attention.1} parent=5 // pred_check_branch
        %144 = sbr.rel (%p142) target = $region24
      $region23: #{channel_attention.1} parent=5 // pred_region
        // Predicated region
        $region25: #{channel_attention.1} parent=23 // pred_check
          %p145 = pneg %p46
        $region26: #{channel_attention.1} parent=23 // pred_check_branch
          %147 = sbr.rel (%p145) target = $region28
        $region27: #{channel_attention.1} parent=23 // pred_region
          %s148 = smul.u32 2, %s20
          %p149 = scmp.lt.s32.totalorder %s19, 1
          %s150 = scalar_select %p149, %s19, 1
          %p151 = scmp.lt.s32.totalorder %s148, 1
          %s152 = scalar_select %p151, %s148, 1
          %s153 = smul.addr %s150, 16
          %s154 = sadd.s32 %s152, %s153
          %s155 = smul.addr %s154, 8
          %s156 = scalar_lea.vmem %s0, %s155
          %s157 = smul.u32 2, %s20
        $region28: #{channel_attention.1} parent=23 // pred_fallthru
          _
      $region24: #{channel_attention.1} parent=5 // pred_fallthru
        _
      %p158 = scmp.le.s32.totalorder 1, %s12
      %p159 = scmp.lt.s32.totalorder %s12, 3
      %p160 = pnand %p158, %p159
      %p161 = pneg %p160
      // Predicated region
      $region29: #{channel_attention.1} parent=5 // pred_check
        _
      $region30: #{channel_attention.1} parent=5 // pred_check_branch
        %163 = sbr.rel (%p160) target = $region32
      $region31: #{channel_attention.1} parent=5 // pred_region
        %s164 = ssub.s32 %s12, 1
        %s165 = smul.u32 2, %s22
        %p166 = scmp.lt.s32.totalorder %s21, 1
        %s167 = scalar_select %p166, %s21, 1
        %p168 = scmp.lt.s32.totalorder %s165, 1
        %s169 = scalar_select %p168, %s165, 1
        %s170 = smul.addr %s167, 16
        %s171 = sadd.s32 %s169, %s170
        %s172 = smul.addr %s171, 8
        %s173 = scalar_lea.vmem %s0, %s172
        %p174 = pneg %p52
        %p175 = pneg %p49
        %p176 = pneg %p73
        %p177 = pneg %p70
        %p178 = pneg %p94
        %p179 = pneg %p91
        %p180 = pneg %p120
        %p181 = pneg %p117
        %s182 = sand.u32 %s107, 1
        %s183 = scalar_lea.sflag [#allocation5], %s182
        %s184 = sand.u32 %s107, 1
        %s185 = scalar_lea.vmem [#allocation4], %s184
        %s186 = smul.u32 2, %s22
        %p187 = scmp.lt.s32.totalorder %s21, 1
        %s188 = scalar_select %p187, %s21, 1
        %p189 = scmp.lt.s32.totalorder %s186, 1
        %s190 = scalar_select %p189, %s186, 1
        %s191 = smul.addr %s188, 16
        %s192 = sadd.s32 %s190, %s191
        %s193 = smul.addr %s192, 8
        %s194 = scalar_lea.vmem %s0, %s193
        %s195 = smul.u32 2, %s22
        %p196 = scmp.eq.s32.totalorder %s22, 0
        // Predicated region
        $region33: #{channel_attention.1} parent=31 // pred_check
          %p197 = pneg %p196
        $region34: #{channel_attention.1} parent=31 // pred_check_branch
          %199 = sbr.rel (%p197) target = $region36
        $region35: #{channel_attention.1} parent=31 // pred_region
          %vm200 = vcmask 516096
          %201 = vst.msk [vmem:[#allocation2] sm:$0x1] %vm200, 0.0
          %202 = vst.msk [vmem:[#allocation3] sm:$0x1] %vm200, -inf
        $region36: #{channel_attention.1} parent=31 // pred_fallthru
          _
        %v203 = vld [vmem:[%s194] sm:$0xff]
        %v204 = vld [vmem:[%s194 + $0x8] sm:$0xff]
        %v205 = vld [vmem:[%s194 + $0x10] sm:$0xff]
        %v206 = vld [vmem:[%s194 + $0x18] sm:$0xff]
        %v207 = vld [vmem:[%s194 + $0x20] sm:$0xff]
        %v208 = vld [vmem:[%s194 + $0x28] sm:$0xff]
        %v209 = vld [vmem:[%s194 + $0x30] sm:$0xff]
        %v210 = vld [vmem:[%s194 + $0x38] sm:$0xff]
        %v211 = vld [vmem:[%s194 + $0x40] sm:$0xff]
        %v212 = vld [vmem:[%s194 + $0x48] sm:$0xff]
        %v213 = vld [vmem:[%s194 + $0x50] sm:$0xff]
        %v214 = vld [vmem:[%s194 + $0x58] sm:$0xff]
        %v215 = vld [vmem:[%s194 + $0x60] sm:$0xff]
        %v216 = vld [vmem:[%s194 + $0x68] sm:$0xff]
        %v217 = vld [vmem:[%s194 + $0x70] sm:$0xff]
        %v218 = vld [vmem:[%s194 + $0x78] sm:$0xff]
        %v219 = vld [vmem:[#allocation2] sm:$0x1]
        %v220 = vadd.f32 %v203, %v204
        %221 = vadd.xlane.f32.xlu0 %v220
        %v222 = vpop.xlane.xlu0 %221
        %v223 = vadd.f32 %v205, %v206
        %224 = vadd.xlane.f32.xlu0 %v223
        %v225 = vpop.xlane.xlu0 %224
        %v226 = vadd.f32 %v207, %v208
        %227 = vadd.xlane.f32.xlu0 %v226
        %v228 = vpop.xlane.xlu0 %227
        %v229 = vadd.f32 %v209, %v210
        %230 = vadd.xlane.f32.xlu0 %v229
        %v231 = vpop.xlane.xlu0 %230
        %v232 = vadd.f32 %v211, %v212
        %233 = vadd.xlane.f32.xlu0 %v232
        %v234 = vpop.xlane.xlu0 %233
        %v235 = vadd.f32 %v213, %v214
        %236 = vadd.xlane.f32.xlu0 %v235
        %v237 = vpop.xlane.xlu0 %236
        %v238 = vadd.f32 %v215, %v216
        %239 = vadd.xlane.f32.xlu0 %v238
        %v240 = vpop.xlane.xlu0 %239
        %v241 = vadd.f32 %v217, %v218
        %242 = vadd.xlane.f32.xlu0 %v241
        %v243 = vpop.xlane.xlu0 %242
        %v252 = vlaneseq
        %v253 = vshrl.u32 %v252, 7
        %v254 = vsub.s32 0, %v253
        %v255 = vrot.slane %v222, %v254
        %v256 = vlaneseq
        %v257 = vshrl.u32 %v256, 7
        %v258 = vsub.s32 1, %v257
        %v259 = vrot.slane %v222, %v258
        %v260 = vlaneseq
        %v261 = vshrl.u32 %v260, 7
        %v262 = vsub.s32 2, %v261
        %v263 = vrot.slane %v222, %v262
        %v264 = vlaneseq
        %v265 = vshrl.u32 %v264, 7
        %v266 = vsub.s32 3, %v265
        %v267 = vrot.slane %v222, %v266
        %v268 = vlaneseq
        %v269 = vshrl.u32 %v268, 7
        %v270 = vsub.s32 4, %v269
        %v271 = vrot.slane %v222, %v270
        %v272 = vlaneseq
        %v273 = vshrl.u32 %v272, 7
        %v274 = vsub.s32 5, %v273
        %v275 = vrot.slane %v222, %v274
        %v276 = vlaneseq
        %v277 = vshrl.u32 %v276, 7
        %v278 = vsub.s32 6, %v277
        %v279 = vrot.slane %v222, %v278
        %v280 = vlaneseq
        %v281 = vshrl.u32 %v280, 7
        %v282 = vsub.s32 7, %v281
        %v283 = vrot.slane %v222, %v282
        %v284 = vlaneseq
        %v285 = vshrl.u32 %v284, 7
        %v286 = vsub.s32 0, %v285
        %v287 = vrot.slane %v225, %v286
        %v288 = vlaneseq
        %v289 = vshrl.u32 %v288, 7
        %v290 = vsub.s32 1, %v289
        %v291 = vrot.slane %v225, %v290
        %v292 = vlaneseq
        %v293 = vshrl.u32 %v292, 7
        %v294 = vsub.s32 2, %v293
        %v295 = vrot.slane %v225, %v294
        %v296 = vlaneseq
        %v297 = vshrl.u32 %v296, 7
        %v298 = vsub.s32 3, %v297
        %v299 = vrot.slane %v225, %v298
        %v300 = vlaneseq
        %v301 = vshrl.u32 %v300, 7
        %v302 = vsub.s32 4, %v301
        %v303 = vrot.slane %v225, %v302
        %v304 = vlaneseq
        %v305 = vshrl.u32 %v304, 7
        %v306 = vsub.s32 5, %v305
        %v307 = vrot.slane %v225, %v306
        %v308 = vlaneseq
        %v309 = vshrl.u32 %v308, 7
        %v310 = vsub.s32 6, %v309
        %v311 = vrot.slane %v225, %v310
        %v312 = vlaneseq
        %v313 = vshrl.u32 %v312, 7
        %v314 = vsub.s32 7, %v313
        %v315 = vrot.slane %v225, %v314
        %v316 = vlaneseq
        %v317 = vshrl.u32 %v316, 7
        %v318 = vsub.s32 0, %v317
        %v319 = vrot.slane %v228, %v318
        %v320 = vlaneseq
        %v321 = vshrl.u32 %v320, 7
        %v322 = vsub.s32 1, %v321
        %v323 = vrot.slane %v228, %v322
        %v324 = vlaneseq
        %v325 = vshrl.u32 %v324, 7
        %v326 = vsub.s32 2, %v325
        %v327 = vrot.slane %v228, %v326
        %v328 = vlaneseq
        %v329 = vshrl.u32 %v328, 7
        %v330 = vsub.s32 3, %v329
        %v331 = vrot.slane %v228, %v330
        %v332 = vlaneseq
        %v333 = vshrl.u32 %v332, 7
        %v334 = vsub.s32 4, %v333
        %v335 = vrot.slane %v228, %v334
        %v336 = vlaneseq
        %v337 = vshrl.u32 %v336, 7
        %v338 = vsub.s32 5, %v337
        %v339 = vrot.slane %v228, %v338
        %v340 = vlaneseq
        %v341 = vshrl.u32 %v340, 7
        %v342 = vsub.s32 6, %v341
        %v343 = vrot.slane %v228, %v342
        %v344 = vlaneseq
        %v345 = vshrl.u32 %v344, 7
        %v346 = vsub.s32 7, %v345
        %v347 = vrot.slane %v228, %v346
        %v348 = vlaneseq
        %v349 = vshrl.u32 %v348, 7
        %v350 = vsub.s32 0, %v349
        %v351 = vrot.slane %v231, %v350
        %v352 = vlaneseq
        %v353 = vshrl.u32 %v352, 7
        %v354 = vsub.s32 1, %v353
        %v355 = vrot.slane %v231, %v354
        %v356 = vlaneseq
        %v357 = vshrl.u32 %v356, 7
        %v358 = vsub.s32 2, %v357
        %v359 = vrot.slane %v231, %v358
        %v360 = vlaneseq
        %v361 = vshrl.u32 %v360, 7
        %v362 = vsub.s32 3, %v361
        %v363 = vrot.slane %v231, %v362
        %v364 = vlaneseq
        %v365 = vshrl.u32 %v364, 7
        %v366 = vsub.s32 4, %v365
        %v367 = vrot.slane %v231, %v366
        %v368 = vlaneseq
        %v369 = vshrl.u32 %v368, 7
        %v370 = vsub.s32 5, %v369
        %v371 = vrot.slane %v231, %v370
        %v372 = vlaneseq
        %v373 = vshrl.u32 %v372, 7
        %v374 = vsub.s32 6, %v373
        %v375 = vrot.slane %v231, %v374
        %v376 = vlaneseq
        %v377 = vshrl.u32 %v376, 7
        %v378 = vsub.s32 7, %v377
        %v379 = vrot.slane %v231, %v378
        %v380 = vlaneseq
        %v381 = vshrl.u32 %v380, 7
        %v382 = vsub.s32 0, %v381
        %v383 = vrot.slane %v234, %v382
        %v384 = vlaneseq
        %v385 = vshrl.u32 %v384, 7
        %v386 = vsub.s32 1, %v385
        %v387 = vrot.slane %v234, %v386
        %v388 = vlaneseq
        %v389 = vshrl.u32 %v388, 7
        %v390 = vsub.s32 2, %v389
        %v391 = vrot.slane %v234, %v390
        %v392 = vlaneseq
        %v393 = vshrl.u32 %v392, 7
        %v394 = vsub.s32 3, %v393
        %v395 = vrot.slane %v234, %v394
        %v396 = vlaneseq
        %v397 = vshrl.u32 %v396, 7
        %v398 = vsub.s32 4, %v397
        %v399 = vrot.slane %v234, %v398
        %v400 = vlaneseq
        %v401 = vshrl.u32 %v400, 7
        %v402 = vsub.s32 5, %v401
        %v403 = vrot.slane %v234, %v402
        %v404 = vlaneseq
        %v405 = vshrl.u32 %v404, 7
        %v406 = vsub.s32 6, %v405
        %v407 = vrot.slane %v234, %v406
        %v408 = vlaneseq
        %v409 = vshrl.u32 %v408, 7
        %v410 = vsub.s32 7, %v409
        %v411 = vrot.slane %v234, %v410
        %v412 = vlaneseq
        %v413 = vshrl.u32 %v412, 7
        %v414 = vsub.s32 0, %v413
        %v415 = vrot.slane %v237, %v414
        %v416 = vlaneseq
        %v417 = vshrl.u32 %v416, 7
        %v418 = vsub.s32 1, %v417
        %v419 = vrot.slane %v237, %v418
        %v420 = vlaneseq
        %v421 = vshrl.u32 %v420, 7
        %v422 = vsub.s32 2, %v421
        %v423 = vrot.slane %v237, %v422
        %v424 = vlaneseq
        %v425 = vshrl.u32 %v424, 7
        %v426 = vsub.s32 3, %v425
        %v427 = vrot.slane %v237, %v426
        %v428 = vlaneseq
        %v429 = vshrl.u32 %v428, 7
        %v430 = vsub.s32 4, %v429
        %v431 = vrot.slane %v237, %v430
        %v432 = vlaneseq
        %v433 = vshrl.u32 %v432, 7
        %v434 = vsub.s32 5, %v433
        %v435 = vrot.slane %v237, %v434
        %v436 = vlaneseq
        %v437 = vshrl.u32 %v436, 7
        %v438 = vsub.s32 6, %v437
        %v439 = vrot.slane %v237, %v438
        %v440 = vlaneseq
        %v441 = vshrl.u32 %v440, 7
        %v442 = vsub.s32 7, %v441
        %v443 = vrot.slane %v237, %v442
        %v444 = vlaneseq
        %v445 = vshrl.u32 %v444, 7
        %v446 = vsub.s32 0, %v445
        %v447 = vrot.slane %v240, %v446
        %v448 = vlaneseq
        %v449 = vshrl.u32 %v448, 7
        %v450 = vsub.s32 1, %v449
        %v451 = vrot.slane %v240, %v450
        %v452 = vlaneseq
        %v453 = vshrl.u32 %v452, 7
        %v454 = vsub.s32 2, %v453
        %v455 = vrot.slane %v240, %v454
        %v456 = vlaneseq
        %v457 = vshrl.u32 %v456, 7
        %v458 = vsub.s32 3, %v457
        %v459 = vrot.slane %v240, %v458
        %v460 = vlaneseq
        %v461 = vshrl.u32 %v460, 7
        %v462 = vsub.s32 4, %v461
        %v463 = vrot.slane %v240, %v462
        %v464 = vlaneseq
        %v465 = vshrl.u32 %v464, 7
        %v466 = vsub.s32 5, %v465
        %v467 = vrot.slane %v240, %v466
        %v468 = vlaneseq
        %v469 = vshrl.u32 %v468, 7
        %v470 = vsub.s32 6, %v469
        %v471 = vrot.slane %v240, %v470
        %v472 = vlaneseq
        %v473 = vshrl.u32 %v472, 7
        %v474 = vsub.s32 7, %v473
        %v475 = vrot.slane %v240, %v474
        %v476 = vlaneseq
        %v477 = vshrl.u32 %v476, 7
        %v478 = vsub.s32 0, %v477
        %v479 = vrot.slane %v243, %v478
        %v480 = vlaneseq
        %v481 = vshrl.u32 %v480, 7
        %v482 = vsub.s32 1, %v481
        %v483 = vrot.slane %v243, %v482
        %v484 = vlaneseq
        %v485 = vshrl.u32 %v484, 7
        %v486 = vsub.s32 2, %v485
        %v487 = vrot.slane %v243, %v486
        %v488 = vlaneseq
        %v489 = vshrl.u32 %v488, 7
        %v490 = vsub.s32 3, %v489
        %v491 = vrot.slane %v243, %v490
        %v492 = vlaneseq
        %v493 = vshrl.u32 %v492, 7
        %v494 = vsub.s32 4, %v493
        %v495 = vrot.slane %v243, %v494
        %v496 = vlaneseq
        %v497 = vshrl.u32 %v496, 7
        %v498 = vsub.s32 5, %v497
        %v499 = vrot.slane %v243, %v498
        %v500 = vlaneseq
        %v501 = vshrl.u32 %v500, 7
        %v502 = vsub.s32 6, %v501
        %v503 = vrot.slane %v243, %v502
        %v504 = vlaneseq
        %v505 = vshrl.u32 %v504, 7
        %v506 = vsub.s32 7, %v505
        %v507 = vrot.slane %v243, %v506
        %v508 = vcombine.low %v255, %v259
        %v509 = vcombine.low %v263, %v267
        %v510 = vcombine.low %v271, %v275
        %v511 = vcombine.low %v279, %v283
        %v513 = vunpack.c.l.s4 1966171168
        %v514 = vunpack.c.0.s8 %v513
        %v515 = vlaneseq
        %v516 = vshrl.u32 %v515, 7
        %v517 = vsub.s32 %v514, %v516
        %v518 = vrot.slane %v508, %v517
        %v520 = vunpack.c.l.s4 1966171168
        %v521 = vunpack.c.0.s8 %v520
        %v522 = vlaneseq
        %v523 = vshrl.u32 %v522, 7
        %v524 = vsub.s32 %v521, %v523
        %v525 = vrot.slane %v509, %v524
        %v527 = vunpack.c.l.s4 1966171168
        %v528 = vunpack.c.0.s8 %v527
        %v529 = vlaneseq
        %v530 = vshrl.u32 %v529, 7
        %v531 = vsub.s32 %v528, %v530
        %v532 = vrot.slane %v510, %v531
        %v534 = vunpack.c.l.s4 1966171168
        %v535 = vunpack.c.0.s8 %v534
        %v536 = vlaneseq
        %v537 = vshrl.u32 %v536, 7
        %v538 = vsub.s32 %v535, %v537
        %v539 = vrot.slane %v511, %v538
        %v540 = vcombine.low %v518, %v525
        %v541 = vcombine.low %v532, %v539
        %v543 = vunpack.c.l.s4 1966171168
        %v544 = vunpack.c.0.s8 %v543
        %v545 = vlaneseq
        %v546 = vshrl.u32 %v545, 7
        %v547 = vsub.s32 %v544, %v546
        %v548 = vrot.slane %v540, %v547
        %v550 = vunpack.c.l.s4 1966171168
        %v551 = vunpack.c.0.s8 %v550
        %v552 = vlaneseq
        %v553 = vshrl.u32 %v552, 7
        %v554 = vsub.s32 %v551, %v553
        %v555 = vrot.slane %v541, %v554
        %v556 = vcombine.low %v548, %v555
        %v557 = vcombine.low %v287, %v291
        %v558 = vcombine.low %v295, %v299
        %v559 = vcombine.low %v303, %v307
        %v560 = vcombine.low %v311, %v315
        %v562 = vunpack.c.l.s4 1966171168
        %v563 = vunpack.c.0.s8 %v562
        %v564 = vlaneseq
        %v565 = vshrl.u32 %v564, 7
        %v566 = vsub.s32 %v563, %v565
        %v567 = vrot.slane %v557, %v566
        %v569 = vunpack.c.l.s4 1966171168
        %v570 = vunpack.c.0.s8 %v569
        %v571 = vlaneseq
        %v572 = vshrl.u32 %v571, 7
        %v573 = vsub.s32 %v570, %v572
        %v574 = vrot.slane %v558, %v573
        %v576 = vunpack.c.l.s4 1966171168
        %v577 = vunpack.c.0.s8 %v576
        %v578 = vlaneseq
        %v579 = vshrl.u32 %v578, 7
        %v580 = vsub.s32 %v577, %v579
        %v581 = vrot.slane %v559, %v580
        %v583 = vunpack.c.l.s4 1966171168
        %v584 = vunpack.c.0.s8 %v583
        %v585 = vlaneseq
        %v586 = vshrl.u32 %v585, 7
        %v587 = vsub.s32 %v584, %v586
        %v588 = vrot.slane %v560, %v587
        %v589 = vcombine.low %v567, %v574
        %v590 = vcombine.low %v581, %v588
        %v592 = vunpack.c.l.s4 1966171168
        %v593 = vunpack.c.0.s8 %v592
        %v594 = vlaneseq
        %v595 = vshrl.u32 %v594, 7
        %v596 = vsub.s32 %v593, %v595
        %v597 = vrot.slane %v589, %v596
        %v599 = vunpack.c.l.s4 1966171168
        %v600 = vunpack.c.0.s8 %v599
        %v601 = vlaneseq
        %v602 = vshrl.u32 %v601, 7
        %v603 = vsub.s32 %v600, %v602
        %v604 = vrot.slane %v590, %v603
        %v605 = vcombine.low %v597, %v604
        %v606 = vcombine.low %v319, %v323
        %v607 = vcombine.low %v327, %v331
        %v608 = vcombine.low %v335, %v339
        %v609 = vcombine.low %v343, %v347
        %v611 = vunpack.c.l.s4 1966171168
        %v612 = vunpack.c.0.s8 %v611
        %v613 = vlaneseq
        %v614 = vshrl.u32 %v613, 7
        %v615 = vsub.s32 %v612, %v614
        %v616 = vrot.slane %v606, %v615
        %v618 = vunpack.c.l.s4 1966171168
        %v619 = vunpack.c.0.s8 %v618
        %v620 = vlaneseq
        %v621 = vshrl.u32 %v620, 7
        %v622 = vsub.s32 %v619, %v621
        %v623 = vrot.slane %v607, %v622
        %v625 = vunpack.c.l.s4 1966171168
        %v626 = vunpack.c.0.s8 %v625
        %v627 = vlaneseq
        %v628 = vshrl.u32 %v627, 7
        %v629 = vsub.s32 %v626, %v628
        %v630 = vrot.slane %v608, %v629
        %v632 = vunpack.c.l.s4 1966171168
        %v633 = vunpack.c.0.s8 %v632
        %v634 = vlaneseq
        %v635 = vshrl.u32 %v634, 7
        %v636 = vsub.s32 %v633, %v635
        %v637 = vrot.slane %v609, %v636
        %v638 = vcombine.low %v616, %v623
        %v639 = vcombine.low %v630, %v637
        %v641 = vunpack.c.l.s4 1966171168
        %v642 = vunpack.c.0.s8 %v641
        %v643 = vlaneseq
        %v644 = vshrl.u32 %v643, 7
        %v645 = vsub.s32 %v642, %v644
        %v646 = vrot.slane %v638, %v645
        %v648 = vunpack.c.l.s4 1966171168
        %v649 = vunpack.c.0.s8 %v648
        %v650 = vlaneseq
        %v651 = vshrl.u32 %v650, 7
        %v652 = vsub.s32 %v649, %v651
        %v653 = vrot.slane %v639, %v652
        %v654 = vcombine.low %v646, %v653
        %v655 = vcombine.low %v351, %v355
        %v656 = vcombine.low %v359, %v363
        %v657 = vcombine.low %v367, %v371
        %v658 = vcombine.low %v375, %v379
        %v660 = vunpack.c.l.s4 1966171168
        %v661 = vunpack.c.0.s8 %v660
        %v662 = vlaneseq
        %v663 = vshrl.u32 %v662, 7
        %v664 = vsub.s32 %v661, %v663
        %v665 = vrot.slane %v655, %v664
        %v667 = vunpack.c.l.s4 1966171168
        %v668 = vunpack.c.0.s8 %v667
        %v669 = vlaneseq
        %v670 = vshrl.u32 %v669, 7
        %v671 = vsub.s32 %v668, %v670
        %v672 = vrot.slane %v656, %v671
        %v674 = vunpack.c.l.s4 1966171168
        %v675 = vunpack.c.0.s8 %v674
        %v676 = vlaneseq
        %v677 = vshrl.u32 %v676, 7
        %v678 = vsub.s32 %v675, %v677
        %v679 = vrot.slane %v657, %v678
        %v681 = vunpack.c.l.s4 1966171168
        %v682 = vunpack.c.0.s8 %v681
        %v683 = vlaneseq
        %v684 = vshrl.u32 %v683, 7
        %v685 = vsub.s32 %v682, %v684
        %v686 = vrot.slane %v658, %v685
        %v687 = vcombine.low %v665, %v672
        %v688 = vcombine.low %v679, %v686
        %v690 = vunpack.c.l.s4 1966171168
        %v691 = vunpack.c.0.s8 %v690
        %v692 = vlaneseq
        %v693 = vshrl.u32 %v692, 7
        %v694 = vsub.s32 %v691, %v693
        %v695 = vrot.slane %v687, %v694
        %v697 = vunpack.c.l.s4 1966171168
        %v698 = vunpack.c.0.s8 %v697
        %v699 = vlaneseq
        %v700 = vshrl.u32 %v699, 7
        %v701 = vsub.s32 %v698, %v700
        %v702 = vrot.slane %v688, %v701
        %v703 = vcombine.low %v695, %v702
        %v704 = vcombine.low %v383, %v387
        %v705 = vcombine.low %v391, %v395
        %v706 = vcombine.low %v399, %v403
        %v707 = vcombine.low %v407, %v411
        %v709 = vunpack.c.l.s4 1966171168
        %v710 = vunpack.c.0.s8 %v709
        %v711 = vlaneseq
        %v712 = vshrl.u32 %v711, 7
        %v713 = vsub.s32 %v710, %v712
        %v714 = vrot.slane %v704, %v713
        %v716 = vunpack.c.l.s4 1966171168
        %v717 = vunpack.c.0.s8 %v716
        %v718 = vlaneseq
        %v719 = vshrl.u32 %v718, 7
        %v720 = vsub.s32 %v717, %v719
        %v721 = vrot.slane %v705, %v720
        %v723 = vunpack.c.l.s4 1966171168
        %v724 = vunpack.c.0.s8 %v723
        %v725 = vlaneseq
        %v726 = vshrl.u32 %v725, 7
        %v727 = vsub.s32 %v724, %v726
        %v728 = vrot.slane %v706, %v727
        %v730 = vunpack.c.l.s4 1966171168
        %v731 = vunpack.c.0.s8 %v730
        %v732 = vlaneseq
        %v733 = vshrl.u32 %v732, 7
        %v734 = vsub.s32 %v731, %v733
        %v735 = vrot.slane %v707, %v734
        %v736 = vcombine.low %v714, %v721
        %v737 = vcombine.low %v728, %v735
        %v739 = vunpack.c.l.s4 1966171168
        %v740 = vunpack.c.0.s8 %v739
        %v741 = vlaneseq
        %v742 = vshrl.u32 %v741, 7
        %v743 = vsub.s32 %v740, %v742
        %v744 = vrot.slane %v736, %v743
        %v746 = vunpack.c.l.s4 1966171168
        %v747 = vunpack.c.0.s8 %v746
        %v748 = vlaneseq
        %v749 = vshrl.u32 %v748, 7
        %v750 = vsub.s32 %v747, %v749
        %v751 = vrot.slane %v737, %v750
        %v752 = vcombine.low %v744, %v751
        %v753 = vcombine.low %v415, %v419
        %v754 = vcombine.low %v423, %v427
        %v755 = vcombine.low %v431, %v435
        %v756 = vcombine.low %v439, %v443
        %v758 = vunpack.c.l.s4 1966171168
        %v759 = vunpack.c.0.s8 %v758
        %v760 = vlaneseq
        %v761 = vshrl.u32 %v760, 7
        %v762 = vsub.s32 %v759, %v761
        %v763 = vrot.slane %v753, %v762
        %v765 = vunpack.c.l.s4 1966171168
        %v766 = vunpack.c.0.s8 %v765
        %v767 = vlaneseq
        %v768 = vshrl.u32 %v767, 7
        %v769 = vsub.s32 %v766, %v768
        %v770 = vrot.slane %v754, %v769
        %v772 = vunpack.c.l.s4 1966171168
        %v773 = vunpack.c.0.s8 %v772
        %v774 = vlaneseq
        %v775 = vshrl.u32 %v774, 7
        %v776 = vsub.s32 %v773, %v775
        %v777 = vrot.slane %v755, %v776
        %v779 = vunpack.c.l.s4 1966171168
        %v780 = vunpack.c.0.s8 %v779
        %v781 = vlaneseq
        %v782 = vshrl.u32 %v781, 7
        %v783 = vsub.s32 %v780, %v782
        %v784 = vrot.slane %v756, %v783
        %v785 = vcombine.low %v763, %v770
        %v786 = vcombine.low %v777, %v784
        %v788 = vunpack.c.l.s4 1966171168
        %v789 = vunpack.c.0.s8 %v788
        %v790 = vlaneseq
        %v791 = vshrl.u32 %v790, 7
        %v792 = vsub.s32 %v789, %v791
        %v793 = vrot.slane %v785, %v792
        %v795 = vunpack.c.l.s4 1966171168
        %v796 = vunpack.c.0.s8 %v795
        %v797 = vlaneseq
        %v798 = vshrl.u32 %v797, 7
        %v799 = vsub.s32 %v796, %v798
        %v800 = vrot.slane %v786, %v799
        %v801 = vcombine.low %v793, %v800
        %v802 = vcombine.low %v447, %v451
        %v803 = vcombine.low %v455, %v459
        %v804 = vcombine.low %v463, %v467
        %v805 = vcombine.low %v471, %v475
        %v807 = vunpack.c.l.s4 1966171168
        %v808 = vunpack.c.0.s8 %v807
        %v809 = vlaneseq
        %v810 = vshrl.u32 %v809, 7
        %v811 = vsub.s32 %v808, %v810
        %v812 = vrot.slane %v802, %v811
        %v814 = vunpack.c.l.s4 1966171168
        %v815 = vunpack.c.0.s8 %v814
        %v816 = vlaneseq
        %v817 = vshrl.u32 %v816, 7
        %v818 = vsub.s32 %v815, %v817
        %v819 = vrot.slane %v803, %v818
        %v821 = vunpack.c.l.s4 1966171168
        %v822 = vunpack.c.0.s8 %v821
        %v823 = vlaneseq
        %v824 = vshrl.u32 %v823, 7
        %v825 = vsub.s32 %v822, %v824
        %v826 = vrot.slane %v804, %v825
        %v828 = vunpack.c.l.s4 1966171168
        %v829 = vunpack.c.0.s8 %v828
        %v830 = vlaneseq
        %v831 = vshrl.u32 %v830, 7
        %v832 = vsub.s32 %v829, %v831
        %v833 = vrot.slane %v805, %v832
        %v834 = vcombine.low %v812, %v819
        %v835 = vcombine.low %v826, %v833
        %v837 = vunpack.c.l.s4 1966171168
        %v838 = vunpack.c.0.s8 %v837
        %v839 = vlaneseq
        %v840 = vshrl.u32 %v839, 7
        %v841 = vsub.s32 %v838, %v840
        %v842 = vrot.slane %v834, %v841
        %v844 = vunpack.c.l.s4 1966171168
        %v845 = vunpack.c.0.s8 %v844
        %v846 = vlaneseq
        %v847 = vshrl.u32 %v846, 7
        %v848 = vsub.s32 %v845, %v847
        %v849 = vrot.slane %v835, %v848
        %v850 = vcombine.low %v842, %v849
        %v851 = vcombine.low %v479, %v483
        %v852 = vcombine.low %v487, %v491
        %v853 = vcombine.low %v495, %v499
        %v854 = vcombine.low %v503, %v507
        %v856 = vunpack.c.l.s4 1966171168
        %v857 = vunpack.c.0.s8 %v856
        %v858 = vlaneseq
        %v859 = vshrl.u32 %v858, 7
        %v860 = vsub.s32 %v857, %v859
        %v861 = vrot.slane %v851, %v860
        %v863 = vunpack.c.l.s4 1966171168
        %v864 = vunpack.c.0.s8 %v863
        %v865 = vlaneseq
        %v866 = vshrl.u32 %v865, 7
        %v867 = vsub.s32 %v864, %v866
        %v868 = vrot.slane %v852, %v867
        %v870 = vunpack.c.l.s4 1966171168
        %v871 = vunpack.c.0.s8 %v870
        %v872 = vlaneseq
        %v873 = vshrl.u32 %v872, 7
        %v874 = vsub.s32 %v871, %v873
        %v875 = vrot.slane %v853, %v874
        %v877 = vunpack.c.l.s4 1966171168
        %v878 = vunpack.c.0.s8 %v877
        %v879 = vlaneseq
        %v880 = vshrl.u32 %v879, 7
        %v881 = vsub.s32 %v878, %v880
        %v882 = vrot.slane %v854, %v881
        %v883 = vcombine.low %v861, %v868
        %v884 = vcombine.low %v875, %v882
        %v886 = vunpack.c.l.s4 1966171168
        %v887 = vunpack.c.0.s8 %v886
        %v888 = vlaneseq
        %v889 = vshrl.u32 %v888, 7
        %v890 = vsub.s32 %v887, %v889
        %v891 = vrot.slane %v883, %v890
        %v893 = vunpack.c.l.s4 1966171168
        %v894 = vunpack.c.0.s8 %v893
        %v895 = vlaneseq
        %v896 = vshrl.u32 %v895, 7
        %v897 = vsub.s32 %v894, %v896
        %v898 = vrot.slane %v884, %v897
        %v899 = vcombine.low %v891, %v898
        %900 = vset.pattern.permute.xlu0 0
        %901 = vperm.xlu0 %900, %v556
        %v902 = vpop.permute.xlu0 %901
        %903 = vset.pattern.permute.xlu0 0
        %904 = vperm.xlu0 %903, %v605
        %v905 = vpop.permute.xlu0 %904
        %906 = vset.pattern.permute.xlu0 0
        %907 = vperm.xlu0 %906, %v654
        %v908 = vpop.permute.xlu0 %907
        %909 = vset.pattern.permute.xlu0 0
        %910 = vperm.xlu0 %909, %v703
        %v911 = vpop.permute.xlu0 %910
        %912 = vset.pattern.permute.xlu0 0
        %913 = vperm.xlu0 %912, %v752
        %v914 = vpop.permute.xlu0 %913
        %915 = vset.pattern.permute.xlu0 0
        %916 = vperm.xlu0 %915, %v801
        %v917 = vpop.permute.xlu0 %916
        %918 = vset.pattern.permute.xlu0 0
        %919 = vperm.xlu0 %918, %v850
        %v920 = vpop.permute.xlu0 %919
        %921 = vset.pattern.permute.xlu0 0
        %922 = vperm.xlu0 %921, %v899
        %v923 = vpop.permute.xlu0 %922
        %v924 = vlaneseq
        %v925 = vand.u32 %v924, 127
        %v926 = vlaneseq
        %v927 = vshrl.u32 %v926, 7
        %v928 = vsub.s32 %v925, %v927
        %v929 = vrot.slane %v902, %v928
        %v930 = vadd.s32 %v925, 4294967288
        %v931 = vlaneseq
        %v932 = vshrl.u32 %v931, 7
        %v933 = vsub.s32 %v930, %v932
        %v934 = vrot.slane %v905, %v933
        %vm935 = vcmask 130112
        %v936 = vsel %vm935, %v934, %v929
        %v937 = vadd.s32 %v925, 4294967280
        %v938 = vlaneseq
        %v939 = vshrl.u32 %v938, 7
        %v940 = vsub.s32 %v937, %v939
        %v941 = vrot.slane %v908, %v940
        %vm942 = vcmask 195712
        %v943 = vsel %vm942, %v941, %v936
        %v944 = vadd.s32 %v925, 4294967272
        %v945 = vlaneseq
        %v946 = vshrl.u32 %v945, 7
        %v947 = vsub.s32 %v944, %v946
        %v948 = vrot.slane %v911, %v947
        %vm949 = vcmask 261312
        %v950 = vsel %vm949, %v948, %v943
        %v951 = vadd.s32 %v925, 4294967264
        %v952 = vlaneseq
        %v953 = vshrl.u32 %v952, 7
        %v954 = vsub.s32 %v951, %v953
        %v955 = vrot.slane %v914, %v954
        %vm956 = vcmask 326912
        %v957 = vsel %vm956, %v955, %v950
        %v958 = vadd.s32 %v925, 4294967256
        %v959 = vlaneseq
        %v960 = vshrl.u32 %v959, 7
        %v961 = vsub.s32 %v958, %v960
        %v962 = vrot.slane %v917, %v961
        %vm963 = vcmask 392512
        %v964 = vsel %vm963, %v962, %v957
        %v965 = vadd.s32 %v925, 4294967248
        %v966 = vlaneseq
        %v967 = vshrl.u32 %v966, 7
        %v968 = vsub.s32 %v965, %v967
        %v969 = vrot.slane %v920, %v968
        %vm970 = vcmask 458112
        %v971 = vsel %vm970, %v969, %v964
        %v972 = vadd.s32 %v925, 4294967240
        %v973 = vlaneseq
        %v974 = vshrl.u32 %v973, 7
        %v975 = vsub.s32 %v972, %v974
        %v976 = vrot.slane %v923, %v975
        %vm977 = vcmask 523712
        %v978 = vsel %vm977, %v976, %v971
        %v980 = vunpack.c.l.s4 1966171168
        %v981 = vunpack.c.0.s8 %v980
        %v982 = vlaneseq
        %v983 = vshrl.u32 %v982, 7
        %v984 = vsub.s32 %v981, %v983
        %v985 = vrot.slane %v978, %v984
        %v987 = vunpack.c.l.s4 1966171168
        %v988 = vunpack.c.0.s8 %v987
        %v989 = vlaneseq
        %v990 = vshrl.u32 %v989, 7
        %v991 = vsub.s32 %v988, %v990
        %v992 = vrot.slane %v985, %v991
        %v994 = vadd.f32 %v219, %v992
        %vm995 = vcmask 516096
        %996 = vst.msk [vmem:[#allocation2] sm:$0x1] %vm995, %v994
        %v997 = vld [vmem:[#allocation3] sm:$0x1]
        %v998 = vmax.f32 %v203, %v204
        %999 = vmax.xlane.f32.xlu0 %v998
        %v1000 = vpop.xlane.xlu0 %999
        %v1001 = vmax.f32 %v205, %v206
        %1002 = vmax.xlane.f32.xlu0 %v1001
        %v1003 = vpop.xlane.xlu0 %1002
        %v1004 = vmax.f32 %v207, %v208
        %1005 = vmax.xlane.f32.xlu0 %v1004
        %v1006 = vpop.xlane.xlu0 %1005
        %v1007 = vmax.f32 %v209, %v210
        %1008 = vmax.xlane.f32.xlu0 %v1007
        %v1009 = vpop.xlane.xlu0 %1008
        %v1010 = vmax.f32 %v211, %v212
        %1011 = vmax.xlane.f32.xlu0 %v1010
        %v1012 = vpop.xlane.xlu0 %1011
        %v1013 = vmax.f32 %v213, %v214
        %1014 = vmax.xlane.f32.xlu0 %v1013
        %v1015 = vpop.xlane.xlu0 %1014
        %v1016 = vmax.f32 %v215, %v216
        %1017 = vmax.xlane.f32.xlu0 %v1016
        %v1018 = vpop.xlane.xlu0 %1017
        %v1019 = vmax.f32 %v217, %v218
        %1020 = vmax.xlane.f32.xlu0 %v1019
        %v1021 = vpop.xlane.xlu0 %1020
        %v1030 = vlaneseq
        %v1031 = vshrl.u32 %v1030, 7
        %v1032 = vsub.s32 0, %v1031
        %v1033 = vrot.slane %v1000, %v1032
        %v1034 = vlaneseq
        %v1035 = vshrl.u32 %v1034, 7
        %v1036 = vsub.s32 1, %v1035
        %v1037 = vrot.slane %v1000, %v1036
        %v1038 = vlaneseq
        %v1039 = vshrl.u32 %v1038, 7
        %v1040 = vsub.s32 2, %v1039
        %v1041 = vrot.slane %v1000, %v1040
        %v1042 = vlaneseq
        %v1043 = vshrl.u32 %v1042, 7
        %v1044 = vsub.s32 3, %v1043
        %v1045 = vrot.slane %v1000, %v1044
        %v1046 = vlaneseq
        %v1047 = vshrl.u32 %v1046, 7
        %v1048 = vsub.s32 4, %v1047
        %v1049 = vrot.slane %v1000, %v1048
        %v1050 = vlaneseq
        %v1051 = vshrl.u32 %v1050, 7
        %v1052 = vsub.s32 5, %v1051
        %v1053 = vrot.slane %v1000, %v1052
        %v1054 = vlaneseq
        %v1055 = vshrl.u32 %v1054, 7
        %v1056 = vsub.s32 6, %v1055
        %v1057 = vrot.slane %v1000, %v1056
        %v1058 = vlaneseq
        %v1059 = vshrl.u32 %v1058, 7
        %v1060 = vsub.s32 7, %v1059
        %v1061 = vrot.slane %v1000, %v1060
        %v1062 = vlaneseq
        %v1063 = vshrl.u32 %v1062, 7
        %v1064 = vsub.s32 0, %v1063
        %v1065 = vrot.slane %v1003, %v1064
        %v1066 = vlaneseq
        %v1067 = vshrl.u32 %v1066, 7
        %v1068 = vsub.s32 1, %v1067
        %v1069 = vrot.slane %v1003, %v1068
        %v1070 = vlaneseq
        %v1071 = vshrl.u32 %v1070, 7
        %v1072 = vsub.s32 2, %v1071
        %v1073 = vrot.slane %v1003, %v1072
        %v1074 = vlaneseq
        %v1075 = vshrl.u32 %v1074, 7
        %v1076 = vsub.s32 3, %v1075
        %v1077 = vrot.slane %v1003, %v1076
        %v1078 = vlaneseq
        %v1079 = vshrl.u32 %v1078, 7
        %v1080 = vsub.s32 4, %v1079
        %v1081 = vrot.slane %v1003, %v1080
        %v1082 = vlaneseq
        %v1083 = vshrl.u32 %v1082, 7
        %v1084 = vsub.s32 5, %v1083
        %v1085 = vrot.slane %v1003, %v1084
        %v1086 = vlaneseq
        %v1087 = vshrl.u32 %v1086, 7
        %v1088 = vsub.s32 6, %v1087
        %v1089 = vrot.slane %v1003, %v1088
        %v1090 = vlaneseq
        %v1091 = vshrl.u32 %v1090, 7
        %v1092 = vsub.s32 7, %v1091
        %v1093 = vrot.slane %v1003, %v1092
        %v1094 = vlaneseq
        %v1095 = vshrl.u32 %v1094, 7
        %v1096 = vsub.s32 0, %v1095
        %v1097 = vrot.slane %v1006, %v1096
        %v1098 = vlaneseq
        %v1099 = vshrl.u32 %v1098, 7
        %v1100 = vsub.s32 1, %v1099
        %v1101 = vrot.slane %v1006, %v1100
        %v1102 = vlaneseq
        %v1103 = vshrl.u32 %v1102, 7
        %v1104 = vsub.s32 2, %v1103
        %v1105 = vrot.slane %v1006, %v1104
        %v1106 = vlaneseq
        %v1107 = vshrl.u32 %v1106, 7
        %v1108 = vsub.s32 3, %v1107
        %v1109 = vrot.slane %v1006, %v1108
        %v1110 = vlaneseq
        %v1111 = vshrl.u32 %v1110, 7
        %v1112 = vsub.s32 4, %v1111
        %v1113 = vrot.slane %v1006, %v1112
        %v1114 = vlaneseq
        %v1115 = vshrl.u32 %v1114, 7
        %v1116 = vsub.s32 5, %v1115
        %v1117 = vrot.slane %v1006, %v1116
        %v1118 = vlaneseq
        %v1119 = vshrl.u32 %v1118, 7
        %v1120 = vsub.s32 6, %v1119
        %v1121 = vrot.slane %v1006, %v1120
        %v1122 = vlaneseq
        %v1123 = vshrl.u32 %v1122, 7
        %v1124 = vsub.s32 7, %v1123
        %v1125 = vrot.slane %v1006, %v1124
        %v1126 = vlaneseq
        %v1127 = vshrl.u32 %v1126, 7
        %v1128 = vsub.s32 0, %v1127
        %v1129 = vrot.slane %v1009, %v1128
        %v1130 = vlaneseq
        %v1131 = vshrl.u32 %v1130, 7
        %v1132 = vsub.s32 1, %v1131
        %v1133 = vrot.slane %v1009, %v1132
        %v1134 = vlaneseq
        %v1135 = vshrl.u32 %v1134, 7
        %v1136 = vsub.s32 2, %v1135
        %v1137 = vrot.slane %v1009, %v1136
        %v1138 = vlaneseq
        %v1139 = vshrl.u32 %v1138, 7
        %v1140 = vsub.s32 3, %v1139
        %v1141 = vrot.slane %v1009, %v1140
        %v1142 = vlaneseq
        %v1143 = vshrl.u32 %v1142, 7
        %v1144 = vsub.s32 4, %v1143
        %v1145 = vrot.slane %v1009, %v1144
        %v1146 = vlaneseq
        %v1147 = vshrl.u32 %v1146, 7
        %v1148 = vsub.s32 5, %v1147
        %v1149 = vrot.slane %v1009, %v1148
        %v1150 = vlaneseq
        %v1151 = vshrl.u32 %v1150, 7
        %v1152 = vsub.s32 6, %v1151
        %v1153 = vrot.slane %v1009, %v1152
        %v1154 = vlaneseq
        %v1155 = vshrl.u32 %v1154, 7
        %v1156 = vsub.s32 7, %v1155
        %v1157 = vrot.slane %v1009, %v1156
        %v1158 = vlaneseq
        %v1159 = vshrl.u32 %v1158, 7
        %v1160 = vsub.s32 0, %v1159
        %v1161 = vrot.slane %v1012, %v1160
        %v1162 = vlaneseq
        %v1163 = vshrl.u32 %v1162, 7
        %v1164 = vsub.s32 1, %v1163
        %v1165 = vrot.slane %v1012, %v1164
        %v1166 = vlaneseq
        %v1167 = vshrl.u32 %v1166, 7
        %v1168 = vsub.s32 2, %v1167
        %v1169 = vrot.slane %v1012, %v1168
        %v1170 = vlaneseq
        %v1171 = vshrl.u32 %v1170, 7
        %v1172 = vsub.s32 3, %v1171
        %v1173 = vrot.slane %v1012, %v1172
        %v1174 = vlaneseq
        %v1175 = vshrl.u32 %v1174, 7
        %v1176 = vsub.s32 4, %v1175
        %v1177 = vrot.slane %v1012, %v1176
        %v1178 = vlaneseq
        %v1179 = vshrl.u32 %v1178, 7
        %v1180 = vsub.s32 5, %v1179
        %v1181 = vrot.slane %v1012, %v1180
        %v1182 = vlaneseq
        %v1183 = vshrl.u32 %v1182, 7
        %v1184 = vsub.s32 6, %v1183
        %v1185 = vrot.slane %v1012, %v1184
        %v1186 = vlaneseq
        %v1187 = vshrl.u32 %v1186, 7
        %v1188 = vsub.s32 7, %v1187
        %v1189 = vrot.slane %v1012, %v1188
        %v1190 = vlaneseq
        %v1191 = vshrl.u32 %v1190, 7
        %v1192 = vsub.s32 0, %v1191
        %v1193 = vrot.slane %v1015, %v1192
        %v1194 = vlaneseq
        %v1195 = vshrl.u32 %v1194, 7
        %v1196 = vsub.s32 1, %v1195
        %v1197 = vrot.slane %v1015, %v1196
        %v1198 = vlaneseq
        %v1199 = vshrl.u32 %v1198, 7
        %v1200 = vsub.s32 2, %v1199
        %v1201 = vrot.slane %v1015, %v1200
        %v1202 = vlaneseq
        %v1203 = vshrl.u32 %v1202, 7
        %v1204 = vsub.s32 3, %v1203
        %v1205 = vrot.slane %v1015, %v1204
        %v1206 = vlaneseq
        %v1207 = vshrl.u32 %v1206, 7
        %v1208 = vsub.s32 4, %v1207
        %v1209 = vrot.slane %v1015, %v1208
        %v1210 = vlaneseq
        %v1211 = vshrl.u32 %v1210, 7
        %v1212 = vsub.s32 5, %v1211
        %v1213 = vrot.slane %v1015, %v1212
        %v1214 = vlaneseq
        %v1215 = vshrl.u32 %v1214, 7
        %v1216 = vsub.s32 6, %v1215
        %v1217 = vrot.slane %v1015, %v1216
        %v1218 = vlaneseq
        %v1219 = vshrl.u32 %v1218, 7
        %v1220 = vsub.s32 7, %v1219
        %v1221 = vrot.slane %v1015, %v1220
        %v1222 = vlaneseq
        %v1223 = vshrl.u32 %v1222, 7
        %v1224 = vsub.s32 0, %v1223
        %v1225 = vrot.slane %v1018, %v1224
        %v1226 = vlaneseq
        %v1227 = vshrl.u32 %v1226, 7
        %v1228 = vsub.s32 1, %v1227
        %v1229 = vrot.slane %v1018, %v1228
        %v1230 = vlaneseq
        %v1231 = vshrl.u32 %v1230, 7
        %v1232 = vsub.s32 2, %v1231
        %v1233 = vrot.slane %v1018, %v1232
        %v1234 = vlaneseq
        %v1235 = vshrl.u32 %v1234, 7
        %v1236 = vsub.s32 3, %v1235
        %v1237 = vrot.slane %v1018, %v1236
        %v1238 = vlaneseq
        %v1239 = vshrl.u32 %v1238, 7
        %v1240 = vsub.s32 4, %v1239
        %v1241 = vrot.slane %v1018, %v1240
        %v1242 = vlaneseq
        %v1243 = vshrl.u32 %v1242, 7
        %v1244 = vsub.s32 5, %v1243
        %v1245 = vrot.slane %v1018, %v1244
        %v1246 = vlaneseq
        %v1247 = vshrl.u32 %v1246, 7
        %v1248 = vsub.s32 6, %v1247
        %v1249 = vrot.slane %v1018, %v1248
        %v1250 = vlaneseq
        %v1251 = vshrl.u32 %v1250, 7
        %v1252 = vsub.s32 7, %v1251
        %v1253 = vrot.slane %v1018, %v1252
        %v1254 = vlaneseq
        %v1255 = vshrl.u32 %v1254, 7
        %v1256 = vsub.s32 0, %v1255
        %v1257 = vrot.slane %v1021, %v1256
        %v1258 = vlaneseq
        %v1259 = vshrl.u32 %v1258, 7
        %v1260 = vsub.s32 1, %v1259
        %v1261 = vrot.slane %v1021, %v1260
        %v1262 = vlaneseq
        %v1263 = vshrl.u32 %v1262, 7
        %v1264 = vsub.s32 2, %v1263
        %v1265 = vrot.slane %v1021, %v1264
        %v1266 = vlaneseq
        %v1267 = vshrl.u32 %v1266, 7
        %v1268 = vsub.s32 3, %v1267
        %v1269 = vrot.slane %v1021, %v1268
        %v1270 = vlaneseq
        %v1271 = vshrl.u32 %v1270, 7
        %v1272 = vsub.s32 4, %v1271
        %v1273 = vrot.slane %v1021, %v1272
        %v1274 = vlaneseq
        %v1275 = vshrl.u32 %v1274, 7
        %v1276 = vsub.s32 5, %v1275
        %v1277 = vrot.slane %v1021, %v1276
        %v1278 = vlaneseq
        %v1279 = vshrl.u32 %v1278, 7
        %v1280 = vsub.s32 6, %v1279
        %v1281 = vrot.slane %v1021, %v1280
        %v1282 = vlaneseq
        %v1283 = vshrl.u32 %v1282, 7
        %v1284 = vsub.s32 7, %v1283
        %v1285 = vrot.slane %v1021, %v1284
        %v1286 = vcombine.low %v1033, %v1037
        %v1287 = vcombine.low %v1041, %v1045
        %v1288 = vcombine.low %v1049, %v1053
        %v1289 = vcombine.low %v1057, %v1061
        %v1291 = vunpack.c.l.s4 1966171168
        %v1292 = vunpack.c.0.s8 %v1291
        %v1293 = vlaneseq
        %v1294 = vshrl.u32 %v1293, 7
        %v1295 = vsub.s32 %v1292, %v1294
        %v1296 = vrot.slane %v1286, %v1295
        %v1298 = vunpack.c.l.s4 1966171168
        %v1299 = vunpack.c.0.s8 %v1298
        %v1300 = vlaneseq
        %v1301 = vshrl.u32 %v1300, 7
        %v1302 = vsub.s32 %v1299, %v1301
        %v1303 = vrot.slane %v1287, %v1302
        %v1305 = vunpack.c.l.s4 1966171168
        %v1306 = vunpack.c.0.s8 %v1305
        %v1307 = vlaneseq
        %v1308 = vshrl.u32 %v1307, 7
        %v1309 = vsub.s32 %v1306, %v1308
        %v1310 = vrot.slane %v1288, %v1309
        %v1312 = vunpack.c.l.s4 1966171168
        %v1313 = vunpack.c.0.s8 %v1312
        %v1314 = vlaneseq
        %v1315 = vshrl.u32 %v1314, 7
        %v1316 = vsub.s32 %v1313, %v1315
        %v1317 = vrot.slane %v1289, %v1316
        %v1318 = vcombine.low %v1296, %v1303
        %v1319 = vcombine.low %v1310, %v1317
        %v1321 = vunpack.c.l.s4 1966171168
        %v1322 = vunpack.c.0.s8 %v1321
        %v1323 = vlaneseq
        %v1324 = vshrl.u32 %v1323, 7
        %v1325 = vsub.s32 %v1322, %v1324
        %v1326 = vrot.slane %v1318, %v1325
        %v1328 = vunpack.c.l.s4 1966171168
        %v1329 = vunpack.c.0.s8 %v1328
        %v1330 = vlaneseq
        %v1331 = vshrl.u32 %v1330, 7
        %v1332 = vsub.s32 %v1329, %v1331
        %v1333 = vrot.slane %v1319, %v1332
        %v1334 = vcombine.low %v1326, %v1333
        %v1335 = vcombine.low %v1065, %v1069
        %v1336 = vcombine.low %v1073, %v1077
        %v1337 = vcombine.low %v1081, %v1085
        %v1338 = vcombine.low %v1089, %v1093
        %v1340 = vunpack.c.l.s4 1966171168
        %v1341 = vunpack.c.0.s8 %v1340
        %v1342 = vlaneseq
        %v1343 = vshrl.u32 %v1342, 7
        %v1344 = vsub.s32 %v1341, %v1343
        %v1345 = vrot.slane %v1335, %v1344
        %v1347 = vunpack.c.l.s4 1966171168
        %v1348 = vunpack.c.0.s8 %v1347
        %v1349 = vlaneseq
        %v1350 = vshrl.u32 %v1349, 7
        %v1351 = vsub.s32 %v1348, %v1350
        %v1352 = vrot.slane %v1336, %v1351
        %v1354 = vunpack.c.l.s4 1966171168
        %v1355 = vunpack.c.0.s8 %v1354
        %v1356 = vlaneseq
        %v1357 = vshrl.u32 %v1356, 7
        %v1358 = vsub.s32 %v1355, %v1357
        %v1359 = vrot.slane %v1337, %v1358
        %v1361 = vunpack.c.l.s4 1966171168
        %v1362 = vunpack.c.0.s8 %v1361
        %v1363 = vlaneseq
        %v1364 = vshrl.u32 %v1363, 7
        %v1365 = vsub.s32 %v1362, %v1364
        %v1366 = vrot.slane %v1338, %v1365
        %v1367 = vcombine.low %v1345, %v1352
        %v1368 = vcombine.low %v1359, %v1366
        %v1370 = vunpack.c.l.s4 1966171168
        %v1371 = vunpack.c.0.s8 %v1370
        %v1372 = vlaneseq
        %v1373 = vshrl.u32 %v1372, 7
        %v1374 = vsub.s32 %v1371, %v1373
        %v1375 = vrot.slane %v1367, %v1374
        %v1377 = vunpack.c.l.s4 1966171168
        %v1378 = vunpack.c.0.s8 %v1377
        %v1379 = vlaneseq
        %v1380 = vshrl.u32 %v1379, 7
        %v1381 = vsub.s32 %v1378, %v1380
        %v1382 = vrot.slane %v1368, %v1381
        %v1383 = vcombine.low %v1375, %v1382
        %v1384 = vcombine.low %v1097, %v1101
        %v1385 = vcombine.low %v1105, %v1109
        %v1386 = vcombine.low %v1113, %v1117
        %v1387 = vcombine.low %v1121, %v1125
        %v1389 = vunpack.c.l.s4 1966171168
        %v1390 = vunpack.c.0.s8 %v1389
        %v1391 = vlaneseq
        %v1392 = vshrl.u32 %v1391, 7
        %v1393 = vsub.s32 %v1390, %v1392
        %v1394 = vrot.slane %v1384, %v1393
        %v1396 = vunpack.c.l.s4 1966171168
        %v1397 = vunpack.c.0.s8 %v1396
        %v1398 = vlaneseq
        %v1399 = vshrl.u32 %v1398, 7
        %v1400 = vsub.s32 %v1397, %v1399
        %v1401 = vrot.slane %v1385, %v1400
        %v1403 = vunpack.c.l.s4 1966171168
        %v1404 = vunpack.c.0.s8 %v1403
        %v1405 = vlaneseq
        %v1406 = vshrl.u32 %v1405, 7
        %v1407 = vsub.s32 %v1404, %v1406
        %v1408 = vrot.slane %v1386, %v1407
        %v1410 = vunpack.c.l.s4 1966171168
        %v1411 = vunpack.c.0.s8 %v1410
        %v1412 = vlaneseq
        %v1413 = vshrl.u32 %v1412, 7
        %v1414 = vsub.s32 %v1411, %v1413
        %v1415 = vrot.slane %v1387, %v1414
        %v1416 = vcombine.low %v1394, %v1401
        %v1417 = vcombine.low %v1408, %v1415
        %v1419 = vunpack.c.l.s4 1966171168
        %v1420 = vunpack.c.0.s8 %v1419
        %v1421 = vlaneseq
        %v1422 = vshrl.u32 %v1421, 7
        %v1423 = vsub.s32 %v1420, %v1422
        %v1424 = vrot.slane %v1416, %v1423
        %v1426 = vunpack.c.l.s4 1966171168
        %v1427 = vunpack.c.0.s8 %v1426
        %v1428 = vlaneseq
        %v1429 = vshrl.u32 %v1428, 7
        %v1430 = vsub.s32 %v1427, %v1429
        %v1431 = vrot.slane %v1417, %v1430
        %v1432 = vcombine.low %v1424, %v1431
        %v1433 = vcombine.low %v1129, %v1133
        %v1434 = vcombine.low %v1137, %v1141
        %v1435 = vcombine.low %v1145, %v1149
        %v1436 = vcombine.low %v1153, %v1157
        %v1438 = vunpack.c.l.s4 1966171168
        %v1439 = vunpack.c.0.s8 %v1438
        %v1440 = vlaneseq
        %v1441 = vshrl.u32 %v1440, 7
        %v1442 = vsub.s32 %v1439, %v1441
        %v1443 = vrot.slane %v1433, %v1442
        %v1445 = vunpack.c.l.s4 1966171168
        %v1446 = vunpack.c.0.s8 %v1445
        %v1447 = vlaneseq
        %v1448 = vshrl.u32 %v1447, 7
        %v1449 = vsub.s32 %v1446, %v1448
        %v1450 = vrot.slane %v1434, %v1449
        %v1452 = vunpack.c.l.s4 1966171168
        %v1453 = vunpack.c.0.s8 %v1452
        %v1454 = vlaneseq
        %v1455 = vshrl.u32 %v1454, 7
        %v1456 = vsub.s32 %v1453, %v1455
        %v1457 = vrot.slane %v1435, %v1456
        %v1459 = vunpack.c.l.s4 1966171168
        %v1460 = vunpack.c.0.s8 %v1459
        %v1461 = vlaneseq
        %v1462 = vshrl.u32 %v1461, 7
        %v1463 = vsub.s32 %v1460, %v1462
        %v1464 = vrot.slane %v1436, %v1463
        %v1465 = vcombine.low %v1443, %v1450
        %v1466 = vcombine.low %v1457, %v1464
        %v1468 = vunpack.c.l.s4 1966171168
        %v1469 = vunpack.c.0.s8 %v1468
        %v1470 = vlaneseq
        %v1471 = vshrl.u32 %v1470, 7
        %v1472 = vsub.s32 %v1469, %v1471
        %v1473 = vrot.slane %v1465, %v1472
        %v1475 = vunpack.c.l.s4 1966171168
        %v1476 = vunpack.c.0.s8 %v1475
        %v1477 = vlaneseq
        %v1478 = vshrl.u32 %v1477, 7
        %v1479 = vsub.s32 %v1476, %v1478
        %v1480 = vrot.slane %v1466, %v1479
        %v1481 = vcombine.low %v1473, %v1480
        %v1482 = vcombine.low %v1161, %v1165
        %v1483 = vcombine.low %v1169, %v1173
        %v1484 = vcombine.low %v1177, %v1181
        %v1485 = vcombine.low %v1185, %v1189
        %v1487 = vunpack.c.l.s4 1966171168
        %v1488 = vunpack.c.0.s8 %v1487
        %v1489 = vlaneseq
        %v1490 = vshrl.u32 %v1489, 7
        %v1491 = vsub.s32 %v1488, %v1490
        %v1492 = vrot.slane %v1482, %v1491
        %v1494 = vunpack.c.l.s4 1966171168
        %v1495 = vunpack.c.0.s8 %v1494
        %v1496 = vlaneseq
        %v1497 = vshrl.u32 %v1496, 7
        %v1498 = vsub.s32 %v1495, %v1497
        %v1499 = vrot.slane %v1483, %v1498
        %v1501 = vunpack.c.l.s4 1966171168
        %v1502 = vunpack.c.0.s8 %v1501
        %v1503 = vlaneseq
        %v1504 = vshrl.u32 %v1503, 7
        %v1505 = vsub.s32 %v1502, %v1504
        %v1506 = vrot.slane %v1484, %v1505
        %v1508 = vunpack.c.l.s4 1966171168
        %v1509 = vunpack.c.0.s8 %v1508
        %v1510 = vlaneseq
        %v1511 = vshrl.u32 %v1510, 7
        %v1512 = vsub.s32 %v1509, %v1511
        %v1513 = vrot.slane %v1485, %v1512
        %v1514 = vcombine.low %v1492, %v1499
        %v1515 = vcombine.low %v1506, %v1513
        %v1517 = vunpack.c.l.s4 1966171168
        %v1518 = vunpack.c.0.s8 %v1517
        %v1519 = vlaneseq
        %v1520 = vshrl.u32 %v1519, 7
        %v1521 = vsub.s32 %v1518, %v1520
        %v1522 = vrot.slane %v1514, %v1521
        %v1524 = vunpack.c.l.s4 1966171168
        %v1525 = vunpack.c.0.s8 %v1524
        %v1526 = vlaneseq
        %v1527 = vshrl.u32 %v1526, 7
        %v1528 = vsub.s32 %v1525, %v1527
        %v1529 = vrot.slane %v1515, %v1528
        %v1530 = vcombine.low %v1522, %v1529
        %v1531 = vcombine.low %v1193, %v1197
        %v1532 = vcombine.low %v1201, %v1205
        %v1533 = vcombine.low %v1209, %v1213
        %v1534 = vcombine.low %v1217, %v1221
        %v1536 = vunpack.c.l.s4 1966171168
        %v1537 = vunpack.c.0.s8 %v1536
        %v1538 = vlaneseq
        %v1539 = vshrl.u32 %v1538, 7
        %v1540 = vsub.s32 %v1537, %v1539
        %v1541 = vrot.slane %v1531, %v1540
        %v1543 = vunpack.c.l.s4 1966171168
        %v1544 = vunpack.c.0.s8 %v1543
        %v1545 = vlaneseq
        %v1546 = vshrl.u32 %v1545, 7
        %v1547 = vsub.s32 %v1544, %v1546
        %v1548 = vrot.slane %v1532, %v1547
        %v1550 = vunpack.c.l.s4 1966171168
        %v1551 = vunpack.c.0.s8 %v1550
        %v1552 = vlaneseq
        %v1553 = vshrl.u32 %v1552, 7
        %v1554 = vsub.s32 %v1551, %v1553
        %v1555 = vrot.slane %v1533, %v1554
        %v1557 = vunpack.c.l.s4 1966171168
        %v1558 = vunpack.c.0.s8 %v1557
        %v1559 = vlaneseq
        %v1560 = vshrl.u32 %v1559, 7
        %v1561 = vsub.s32 %v1558, %v1560
        %v1562 = vrot.slane %v1534, %v1561
        %v1563 = vcombine.low %v1541, %v1548
        %v1564 = vcombine.low %v1555, %v1562
        %v1566 = vunpack.c.l.s4 1966171168
        %v1567 = vunpack.c.0.s8 %v1566
        %v1568 = vlaneseq
        %v1569 = vshrl.u32 %v1568, 7
        %v1570 = vsub.s32 %v1567, %v1569
        %v1571 = vrot.slane %v1563, %v1570
        %v1573 = vunpack.c.l.s4 1966171168
        %v1574 = vunpack.c.0.s8 %v1573
        %v1575 = vlaneseq
        %v1576 = vshrl.u32 %v1575, 7
        %v1577 = vsub.s32 %v1574, %v1576
        %v1578 = vrot.slane %v1564, %v1577
        %v1579 = vcombine.low %v1571, %v1578
        %v1580 = vcombine.low %v1225, %v1229
        %v1581 = vcombine.low %v1233, %v1237
        %v1582 = vcombine.low %v1241, %v1245
        %v1583 = vcombine.low %v1249, %v1253
        %v1585 = vunpack.c.l.s4 1966171168
        %v1586 = vunpack.c.0.s8 %v1585
        %v1587 = vlaneseq
        %v1588 = vshrl.u32 %v1587, 7
        %v1589 = vsub.s32 %v1586, %v1588
        %v1590 = vrot.slane %v1580, %v1589
        %v1592 = vunpack.c.l.s4 1966171168
        %v1593 = vunpack.c.0.s8 %v1592
        %v1594 = vlaneseq
        %v1595 = vshrl.u32 %v1594, 7
        %v1596 = vsub.s32 %v1593, %v1595
        %v1597 = vrot.slane %v1581, %v1596
        %v1599 = vunpack.c.l.s4 1966171168
        %v1600 = vunpack.c.0.s8 %v1599
        %v1601 = vlaneseq
        %v1602 = vshrl.u32 %v1601, 7
        %v1603 = vsub.s32 %v1600, %v1602
        %v1604 = vrot.slane %v1582, %v1603
        %v1606 = vunpack.c.l.s4 1966171168
        %v1607 = vunpack.c.0.s8 %v1606
        %v1608 = vlaneseq
        %v1609 = vshrl.u32 %v1608, 7
        %v1610 = vsub.s32 %v1607, %v1609
        %v1611 = vrot.slane %v1583, %v1610
        %v1612 = vcombine.low %v1590, %v1597
        %v1613 = vcombine.low %v1604, %v1611
        %v1615 = vunpack.c.l.s4 1966171168
        %v1616 = vunpack.c.0.s8 %v1615
        %v1617 = vlaneseq
        %v1618 = vshrl.u32 %v1617, 7
        %v1619 = vsub.s32 %v1616, %v1618
        %v1620 = vrot.slane %v1612, %v1619
        %v1622 = vunpack.c.l.s4 1966171168
        %v1623 = vunpack.c.0.s8 %v1622
        %v1624 = vlaneseq
        %v1625 = vshrl.u32 %v1624, 7
        %v1626 = vsub.s32 %v1623, %v1625
        %v1627 = vrot.slane %v1613, %v1626
        %v1628 = vcombine.low %v1620, %v1627
        %v1629 = vcombine.low %v1257, %v1261
        %v1630 = vcombine.low %v1265, %v1269
        %v1631 = vcombine.low %v1273, %v1277
        %v1632 = vcombine.low %v1281, %v1285
        %v1634 = vunpack.c.l.s4 1966171168
        %v1635 = vunpack.c.0.s8 %v1634
        %v1636 = vlaneseq
        %v1637 = vshrl.u32 %v1636, 7
        %v1638 = vsub.s32 %v1635, %v1637
        %v1639 = vrot.slane %v1629, %v1638
        %v1641 = vunpack.c.l.s4 1966171168
        %v1642 = vunpack.c.0.s8 %v1641
        %v1643 = vlaneseq
        %v1644 = vshrl.u32 %v1643, 7
        %v1645 = vsub.s32 %v1642, %v1644
        %v1646 = vrot.slane %v1630, %v1645
        %v1648 = vunpack.c.l.s4 1966171168
        %v1649 = vunpack.c.0.s8 %v1648
        %v1650 = vlaneseq
        %v1651 = vshrl.u32 %v1650, 7
        %v1652 = vsub.s32 %v1649, %v1651
        %v1653 = vrot.slane %v1631, %v1652
        %v1655 = vunpack.c.l.s4 1966171168
        %v1656 = vunpack.c.0.s8 %v1655
        %v1657 = vlaneseq
        %v1658 = vshrl.u32 %v1657, 7
        %v1659 = vsub.s32 %v1656, %v1658
        %v1660 = vrot.slane %v1632, %v1659
        %v1661 = vcombine.low %v1639, %v1646
        %v1662 = vcombine.low %v1653, %v1660
        %v1664 = vunpack.c.l.s4 1966171168
        %v1665 = vunpack.c.0.s8 %v1664
        %v1666 = vlaneseq
        %v1667 = vshrl.u32 %v1666, 7
        %v1668 = vsub.s32 %v1665, %v1667
        %v1669 = vrot.slane %v1661, %v1668
        %v1671 = vunpack.c.l.s4 1966171168
        %v1672 = vunpack.c.0.s8 %v1671
        %v1673 = vlaneseq
        %v1674 = vshrl.u32 %v1673, 7
        %v1675 = vsub.s32 %v1672, %v1674
        %v1676 = vrot.slane %v1662, %v1675
        %v1677 = vcombine.low %v1669, %v1676
        %1678 = vset.pattern.permute.xlu0 0
        %1679 = vperm.xlu0 %1678, %v1334
        %v1680 = vpop.permute.xlu0 %1679
        %1681 = vset.pattern.permute.xlu0 0
        %1682 = vperm.xlu0 %1681, %v1383
        %v1683 = vpop.permute.xlu0 %1682
        %1684 = vset.pattern.permute.xlu0 0
        %1685 = vperm.xlu0 %1684, %v1432
        %v1686 = vpop.permute.xlu0 %1685
        %1687 = vset.pattern.permute.xlu0 0
        %1688 = vperm.xlu0 %1687, %v1481
        %v1689 = vpop.permute.xlu0 %1688
        %1690 = vset.pattern.permute.xlu0 0
        %1691 = vperm.xlu0 %1690, %v1530
        %v1692 = vpop.permute.xlu0 %1691
        %1693 = vset.pattern.permute.xlu0 0
        %1694 = vperm.xlu0 %1693, %v1579
        %v1695 = vpop.permute.xlu0 %1694
        %1696 = vset.pattern.permute.xlu0 0
        %1697 = vperm.xlu0 %1696, %v1628
        %v1698 = vpop.permute.xlu0 %1697
        %1699 = vset.pattern.permute.xlu0 0
        %1700 = vperm.xlu0 %1699, %v1677
        %v1701 = vpop.permute.xlu0 %1700
        %v1702 = vlaneseq
        %v1703 = vshrl.u32 %v1702, 7
        %v1704 = vsub.s32 %v925, %v1703
        %v1705 = vrot.slane %v1680, %v1704
        %v1706 = vlaneseq
        %v1707 = vshrl.u32 %v1706, 7
        %v1708 = vsub.s32 %v930, %v1707
        %v1709 = vrot.slane %v1683, %v1708
        %v1710 = vsel %vm935, %v1709, %v1705
        %v1711 = vlaneseq
        %v1712 = vshrl.u32 %v1711, 7
        %v1713 = vsub.s32 %v937, %v1712
        %v1714 = vrot.slane %v1686, %v1713
        %v1715 = vsel %vm942, %v1714, %v1710
        %v1716 = vlaneseq
        %v1717 = vshrl.u32 %v1716, 7
        %v1718 = vsub.s32 %v944, %v1717
        %v1719 = vrot.slane %v1689, %v1718
        %v1720 = vsel %vm949, %v1719, %v1715
        %v1721 = vlaneseq
        %v1722 = vshrl.u32 %v1721, 7
        %v1723 = vsub.s32 %v951, %v1722
        %v1724 = vrot.slane %v1692, %v1723
        %v1725 = vsel %vm956, %v1724, %v1720
        %v1726 = vlaneseq
        %v1727 = vshrl.u32 %v1726, 7
        %v1728 = vsub.s32 %v958, %v1727
        %v1729 = vrot.slane %v1695, %v1728
        %v1730 = vsel %vm963, %v1729, %v1725
        %v1731 = vlaneseq
        %v1732 = vshrl.u32 %v1731, 7
        %v1733 = vsub.s32 %v965, %v1732
        %v1734 = vrot.slane %v1698, %v1733
        %v1735 = vsel %vm970, %v1734, %v1730
        %v1736 = vlaneseq
        %v1737 = vshrl.u32 %v1736, 7
        %v1738 = vsub.s32 %v972, %v1737
        %v1739 = vrot.slane %v1701, %v1738
        %v1740 = vsel %vm977, %v1739, %v1735
        %v1742 = vunpack.c.l.s4 1966171168
        %v1743 = vunpack.c.0.s8 %v1742
        %v1744 = vlaneseq
        %v1745 = vshrl.u32 %v1744, 7
        %v1746 = vsub.s32 %v1743, %v1745
        %v1747 = vrot.slane %v1740, %v1746
        %v1749 = vunpack.c.l.s4 1966171168
        %v1750 = vunpack.c.0.s8 %v1749
        %v1751 = vlaneseq
        %v1752 = vshrl.u32 %v1751, 7
        %v1753 = vsub.s32 %v1750, %v1752
        %v1754 = vrot.slane %v1747, %v1753
        %v1756 = vmax.f32 %v997, %v1754
        %1757 = vst.msk [vmem:[#allocation3] sm:$0x1] %vm995, %v1756
        // Predicated region
        $region37: #{channel_attention.1} parent=31 // pred_check
          %p1758 = pneg %p196
        $region38: #{channel_attention.1} parent=31 // pred_check_branch
          %1760 = sbr.rel (%p1758) target = $region40
        $region39: #{channel_attention.1} parent=31 // pred_region
          %v1761 = vld [vmem:[#allocation2] sm:$0x1]
          %v1762 = vmul.f32 %v1761, 0.00390625
          %v1763 = vld [vmem:[#allocation3] sm:$0x1]
          %v1764 = vld [vmem:[%s1] sm:$0xff]
          %v1765 = vld [vmem:[%s1 + $0x8] sm:$0xff]
          %v1766 = vld [vmem:[%s1 + $0x10] sm:$0xff]
          %v1767 = vld [vmem:[%s1 + $0x18] sm:$0xff]
          %v1768 = vld [vmem:[%s1 + $0x20] sm:$0xff]
          %v1769 = vld [vmem:[%s1 + $0x28] sm:$0xff]
          %v1770 = vld [vmem:[%s1 + $0x30] sm:$0xff]
          %v1771 = vld [vmem:[%s1 + $0x38] sm:$0xff]
          %v1772 = vld [vmem:[%s2] sm:$0xf]
          %vm1773 = vcmask 523264
          %v1775 = vsel %vm1773, %v1762, 0
          %1777 = vmatprep.subr.mxu0 0.0
          %1778 = vmatpush1.msra.mxu0 0.0
          %1779 = vmatprep.subr.mxu0 0.0
          %1780 = vmatpush1.msra.mxu0 0.0
          %1781 = vmatprep.subr.mxu0 0.0
          %1782 = vmatpush1.msra.mxu0 0.0
          %1783 = vmatprep.subr.mxu0 0.0
          %1784 = vmatpush1.msra.mxu0 0.0
          %1785 = vmatprep.subr.mxu0 0.0
          %1786 = vmatpush1.msra.mxu0 0.0
          %1787 = vmatprep.subr.mxu0 0.0
          %1788 = vmatpush1.msra.mxu0 0.0
          %1789 = vmatprep.subr.mxu0 0.0
          %1790 = vmatpush1.msra.mxu0 0.0
          %1791 = vmatprep.subr.mxu0 0.0
          %1792 = vmatpush1.msra.mxu0 0.0
          %1793 = vmatprep.subr.mxu0 0.0
          %1794 = vmatpush1.msra.mxu0 %v1771
          %1795 = vmatprep.subr.mxu0 0.0
          %1796 = vmatpush1.msra.mxu0 %v1770
          %1797 = vmatprep.subr.mxu0 0.0
          %1798 = vmatpush1.msra.mxu0 %v1769
          %1799 = vmatprep.subr.mxu0 0.0
          %1800 = vmatpush1.msra.mxu0 %v1768
          %1801 = vmatprep.subr.mxu0 0.0
          %1802 = vmatpush1.msra.mxu0 %v1767
          %1803 = vmatprep.subr.mxu0 0.0
          %1804 = vmatpush1.msra.mxu0 %v1766
          %1805 = vmatprep.subr.mxu0 0.0
          %1806 = vmatpush1.msra.mxu0 %v1765
          %1807 = vmatprep.subr.mxu0 0.0
          %1808 = vmatpush1.msra.mxu0 %v1764
          %1809 = vmatprep.subr.mxu0 0.0
          %1810 = vmatpush2.msra.mxu0 0.0
          %1811 = vmatprep.subr.mxu0 0.0
          %1812 = vmatpush2.msra.mxu0 0.0
          %1813 = vmatprep.subr.mxu0 0.0
          %1814 = vmatpush2.msra.mxu0 0.0
          %1815 = vmatprep.subr.mxu0 0.0
          %1816 = vmatpush2.msra.mxu0 0.0
          %1817 = vmatprep.subr.mxu0 0.0
          %1818 = vmatpush2.msra.mxu0 0.0
          %1819 = vmatprep.subr.mxu0 0.0
          %1820 = vmatpush2.msra.mxu0 0.0
          %1821 = vmatprep.subr.mxu0 0.0
          %1822 = vmatpush2.msra.mxu0 0.0
          %1823 = vmatprep.subr.mxu0 0.0
          %1824 = vmatpush2.msra.mxu0 0.0
          %1825 = vmatprep.subr.mxu0 0.0
          %1826 = vmatpush2.msra.mxu0 0.0
          %1827 = vmatprep.subr.mxu0 0.0
          %1828 = vmatpush2.msra.mxu0 0.0
          %1829 = vmatprep.subr.mxu0 0.0
          %1830 = vmatpush2.msra.mxu0 0.0
          %1831 = vmatprep.subr.mxu0 0.0
          %1832 = vmatpush2.msra.mxu0 0.0
          %1833 = vmatprep.subr.mxu0 0.0
          %1834 = vmatpush2.msra.mxu0 0.0
          %1835 = vmatprep.subr.mxu0 0.0
          %1836 = vmatpush2.msra.mxu0 0.0
          %1837 = vmatprep.subr.mxu0 0.0
          %1838 = vmatpush2.msra.mxu0 0.0
          %1839 = vmatprep.subr.mxu0 0.0
          %1840 = vmatpush2.msra.mxu0 0.0
          %1841 = vmatprep.mubr.f32.mxu0 0.0
          %1842 = vmatmul.mubr.f32.gmra.mxu0 %v1775
          %v1843 = vpop.f32.mrf.mxu0
          %v1844 = vadd.f32 0.0, %v1843
          %v1845 = vpop.f32.mrf.mxu0
          %1846 = vdwg.mxu0
          %v1847 = vmax.f32 %v1844, 0.0
          %v1849 = vsel %vm1773, %v1763, 0
          %1851 = vmatprep.subr.mxu0 0.0
          %1852 = vmatpush1.msra.mxu0 0.0
          %1853 = vmatprep.subr.mxu0 0.0
          %1854 = vmatpush1.msra.mxu0 0.0
          %1855 = vmatprep.subr.mxu0 0.0
          %1856 = vmatpush1.msra.mxu0 0.0
          %1857 = vmatprep.subr.mxu0 0.0
          %1858 = vmatpush1.msra.mxu0 0.0
          %1859 = vmatprep.subr.mxu0 0.0
          %1860 = vmatpush1.msra.mxu0 0.0
          %1861 = vmatprep.subr.mxu0 0.0
          %1862 = vmatpush1.msra.mxu0 0.0
          %1863 = vmatprep.subr.mxu0 0.0
          %1864 = vmatpush1.msra.mxu0 0.0
          %1865 = vmatprep.subr.mxu0 0.0
          %1866 = vmatpush1.msra.mxu0 0.0
          %1867 = vmatprep.subr.mxu0 0.0
          %1868 = vmatpush1.msra.mxu0 %v1771
          %1869 = vmatprep.subr.mxu0 0.0
          %1870 = vmatpush1.msra.mxu0 %v1770
          %1871 = vmatprep.subr.mxu0 0.0
          %1872 = vmatpush1.msra.mxu0 %v1769
          %1873 = vmatprep.subr.mxu0 0.0
          %1874 = vmatpush1.msra.mxu0 %v1768
          %1875 = vmatprep.subr.mxu0 0.0
          %1876 = vmatpush1.msra.mxu0 %v1767
          %1877 = vmatprep.subr.mxu0 0.0
          %1878 = vmatpush1.msra.mxu0 %v1766
          %1879 = vmatprep.subr.mxu0 0.0
          %1880 = vmatpush1.msra.mxu0 %v1765
          %1881 = vmatprep.subr.mxu0 0.0
          %1882 = vmatpush1.msra.mxu0 %v1764
          %1883 = vmatprep.subr.mxu0 0.0
          %1884 = vmatpush2.msra.mxu0 0.0
          %1885 = vmatprep.subr.mxu0 0.0
          %1886 = vmatpush2.msra.mxu0 0.0
          %1887 = vmatprep.subr.mxu0 0.0
          %1888 = vmatpush2.msra.mxu0 0.0
          %1889 = vmatprep.subr.mxu0 0.0
          %1890 = vmatpush2.msra.mxu0 0.0
          %1891 = vmatprep.subr.mxu0 0.0
          %1892 = vmatpush2.msra.mxu0 0.0
          %1893 = vmatprep.subr.mxu0 0.0
          %1894 = vmatpush2.msra.mxu0 0.0
          %1895 = vmatprep.subr.mxu0 0.0
          %1896 = vmatpush2.msra.mxu0 0.0
          %1897 = vmatprep.subr.mxu0 0.0
          %1898 = vmatpush2.msra.mxu0 0.0
          %1899 = vmatprep.subr.mxu0 0.0
          %1900 = vmatpush2.msra.mxu0 0.0
          %1901 = vmatprep.subr.mxu0 0.0
          %1902 = vmatpush2.msra.mxu0 0.0
          %1903 = vmatprep.subr.mxu0 0.0
          %1904 = vmatpush2.msra.mxu0 0.0
          %1905 = vmatprep.subr.mxu0 0.0
          %1906 = vmatpush2.msra.mxu0 0.0
          %1907 = vmatprep.subr.mxu0 0.0
          %1908 = vmatpush2.msra.mxu0 0.0
          %1909 = vmatprep.subr.mxu0 0.0
          %1910 = vmatpush2.msra.mxu0 0.0
          %1911 = vmatprep.subr.mxu0 0.0
          %1912 = vmatpush2.msra.mxu0 0.0
          %1913 = vmatprep.subr.mxu0 0.0
          %1914 = vmatpush2.msra.mxu0 0.0
          %1915 = vmatprep.mubr.f32.mxu0 0.0
          %1916 = vmatmul.mubr.f32.gmra.mxu0 %v1849
          %v1917 = vpop.f32.mrf.mxu0
          %v1918 = vadd.f32 0.0, %v1917
          %v1919 = vpop.f32.mrf.mxu0
          %1920 = vdwg.mxu0
          %v1921 = vmax.f32 %v1918, 0.0
          %v1922 = vadd.f32 %v1847, %v1921
          %vm1923 = vcmask 31744
          %v1925 = vsel %vm1923, %v1922, 0
          %vm1927 = vcmask 1043456
          %v1929 = vsel %vm1927, %v1772, 0
          %1931 = vmatprep.subr.mxu0 0.0
          %1932 = vmatpush1.msra.mxu0 0.0
          %1933 = vmatprep.subr.mxu0 0.0
          %1934 = vmatpush1.msra.mxu0 0.0
          %1935 = vmatprep.subr.mxu0 0.0
          %1936 = vmatpush1.msra.mxu0 0.0
          %1937 = vmatprep.subr.mxu0 0.0
          %1938 = vmatpush1.msra.mxu0 0.0
          %1939 = vmatprep.subr.mxu0 0.0
          %1940 = vmatpush1.msra.mxu0 0.0
          %1941 = vmatprep.subr.mxu0 0.0
          %1942 = vmatpush1.msra.mxu0 0.0
          %1943 = vmatprep.subr.mxu0 0.0
          %1944 = vmatpush1.msra.mxu0 0.0
          %1945 = vmatprep.subr.mxu0 0.0
          %1946 = vmatpush1.msra.mxu0 0.0
          %1947 = vmatprep.subr.mxu0 0.0
          %1948 = vmatpush1.msra.mxu0 0.0
          %1949 = vmatprep.subr.mxu0 0.0
          %1950 = vmatpush1.msra.mxu0 0.0
          %1951 = vmatprep.subr.mxu0 0.0
          %1952 = vmatpush1.msra.mxu0 0.0
          %1953 = vmatprep.subr.mxu0 0.0
          %1954 = vmatpush1.msra.mxu0 0.0
          %1955 = vmatprep.subr.mxu0 0.0
          %1956 = vmatpush1.msra.mxu0 0.0
          %1957 = vmatprep.subr.mxu0 0.0
          %1958 = vmatpush1.msra.mxu0 0.0
          %1959 = vmatprep.subr.mxu0 0.0
          %1960 = vmatpush1.msra.mxu0 0.0
          %1961 = vmatprep.subr.mxu0 0.0
          %1962 = vmatpush1.msra.mxu0 %v1929
          %1963 = vmatprep.subr.mxu0 0.0
          %1964 = vmatpush2.msra.mxu0 0.0
          %1965 = vmatprep.subr.mxu0 0.0
          %1966 = vmatpush2.msra.mxu0 0.0
          %1967 = vmatprep.subr.mxu0 0.0
          %1968 = vmatpush2.msra.mxu0 0.0
          %1969 = vmatprep.subr.mxu0 0.0
          %1970 = vmatpush2.msra.mxu0 0.0
          %1971 = vmatprep.subr.mxu0 0.0
          %1972 = vmatpush2.msra.mxu0 0.0
          %1973 = vmatprep.subr.mxu0 0.0
          %1974 = vmatpush2.msra.mxu0 0.0
          %1975 = vmatprep.subr.mxu0 0.0
          %1976 = vmatpush2.msra.mxu0 0.0
          %1977 = vmatprep.subr.mxu0 0.0
          %1978 = vmatpush2.msra.mxu0 0.0
          %1979 = vmatprep.subr.mxu0 0.0
          %1980 = vmatpush2.msra.mxu0 0.0
          %1981 = vmatprep.subr.mxu0 0.0
          %1982 = vmatpush2.msra.mxu0 0.0
          %1983 = vmatprep.subr.mxu0 0.0
          %1984 = vmatpush2.msra.mxu0 0.0
          %1985 = vmatprep.subr.mxu0 0.0
          %1986 = vmatpush2.msra.mxu0 0.0
          %1987 = vmatprep.subr.mxu0 0.0
          %1988 = vmatpush2.msra.mxu0 0.0
          %1989 = vmatprep.subr.mxu0 0.0
          %1990 = vmatpush2.msra.mxu0 0.0
          %1991 = vmatprep.subr.mxu0 0.0
          %1992 = vmatpush2.msra.mxu0 0.0
          %1993 = vmatprep.subr.mxu0 0.0
          %1994 = vmatpush2.msra.mxu0 0.0
          %1995 = vmatprep.mubr.f32.mxu0 0.0
          %1996 = vmatmul.mubr.f32.gmra.mxu0 %v1925
          %v1997 = vpop.f32.mrf.mxu0
          %v1998 = vadd.f32 0.0, %v1997
          %v1999 = vpop.f32.mrf.mxu0
          %2000 = vdwg.mxu0
          %v2001 = vxor.u32 %v1998, 2147483648
          %v2002 = vmul.f32 %v2001, 1.442695
          %v2003 = vpow.pop %v2002
          %v2004 = vadd.f32 %v2003, 1.0
          %v2005 = vrcp.pop %v2004
          %v2006 = vmul.f32 1.0, %v2005
          %2007 = vst.msk [vmem:[%s185] sm:$0x1] %vm995, %v2006
        $region40: #{channel_attention.1} parent=31 // pred_fallthru
          _
        %s2008 = sand.u32 %s107, 1
        %s2009 = scalar_lea.sflag [#allocation5], %s2008
        %s2010 = sand.u32 %s107, 1
        %s2011 = scalar_lea.vmem [#allocation4], %s2010
        // Predicated region
        $region41: #{channel_attention.1} parent=31 // pred_check
          %p2012 = pneg %p117
        $region42: #{channel_attention.1} parent=31 // pred_check_branch
          %2014 = sbr.rel (%p2012) target = $region44
        $region43: #{channel_attention.1} parent=31 // pred_region
          %s2016 = ssub.s32 16, 16
          %2017 = vsyncadd %s2009, %s2016
          %s2018 = smul.addr %s21, 16
          %s2019 = scalar_lea.hbm %s3, %s2018
          %s2021 = sshll.u32 %s2011, 4
          %s2022 = int_to_ptr.vmem [resolvable:$true] %s2021
          %2024 = dma.vmem_to_hbm [thread:$0]  %s2022, 16, %s2019, %s2009
        $region44: #{channel_attention.1} parent=31 // pred_fallthru
          _
      $region32: #{channel_attention.1} parent=5 // pred_fallthru
        _
      %p2025 = scmp.le.s32.totalorder 2, %s12
      // Predicated region
      $region45: #{channel_attention.1} parent=5 // pred_check
        %p2026 = pneg %p2025
      $region46: #{channel_attention.1} parent=5 // pred_check_branch
        %2028 = sbr.rel (%p2026) target = $region48
      $region47: #{channel_attention.1} parent=5 // pred_region
        %s2029 = ssub.s32 %s12, 2
        // Predicated region
        $region49: #{channel_attention.1} parent=47 // pred_check
          %p2030 = pneg %p123
        $region50: #{channel_attention.1} parent=47 // pred_check_branch
          %2032 = sbr.rel (%p2030) target = $region52
        $region51: #{channel_attention.1} parent=47 // pred_region
          %s2033 = sand.u32 %s108, 1
          %s2034 = scalar_lea.sflag [#allocation5], %s2033
          %s2035 = sand.u32 %s108, 1
          %s2036 = scalar_lea.vmem [#allocation4], %s2035
          %2037 = dma.done %s2034, 16
        $region52: #{channel_attention.1} parent=47 // pred_fallthru
          _
      $region48: #{channel_attention.1} parent=5 // pred_fallthru
        _
    $region6: #{channel_attention.1} parent=1 // loop_footer
      %s16 = sadd.s32 1, %s12
    $region7: #{channel_attention.1} parent=1 // loop_footer_branch
      %11 = sbr.rel target = $region3
    $region8: #{channel_attention.1} parent=1 // loop_exit
      _
    %2038 = vsyncpa [#allocation5], 1
    %s2039 = scalar_lea.sflag [#allocation5], 1
    %2040 = vsyncpa %s2039, 1

</llo_original>
